<compile_context>
chip_gen: v5e
topology: v5e:2x2
jax: 0.10.0
libtpu: 0.0.40
codegen_flags: <defaults>
</compile_context>

<pallas_src>
import math
import functools

import jax
import jax.numpy as jnp
from jax.experimental import pallas as pl
from jax.experimental.pallas import tpu as pltpu

LN_EPS = 1e-5  # nn.LayerNorm default


def _gelu_tanh(x):
    # exact formula from the reference GELU module (tanh approximation)
    return 0.5 * x * (1.0 + jnp.tanh(math.sqrt(2.0 / math.pi) * (x + 0.044715 * x * x * x)))


def _layernorm(x, gamma, beta):
    mu = jnp.mean(x, axis=-1, keepdims=True)
    var = jnp.mean((x - mu) ** 2, axis=-1, keepdims=True)
    return (x - mu) * jax.lax.rsqrt(var + LN_EPS) * gamma + beta


def encoder_kernel(x_ref, bias_ref,
                   g1_ref, be1_ref, wqkv_ref, wo_ref, bo_ref,
                   g2_ref, be2_ref, w1_ref, b1_ref, w2_ref, b2_ref,
                   out_ref, *, heads, dim_head):
    """All `depth` encoder layers; grid axis 0 = layer index.

    x stays resident in the VMEM output block across layers (constant output
    block index along the 'arbitrary' depth axis); HBM writeback happens once.
    """
    B, N, D = out_ref.shape
    H, dh = heads, dim_head
    G = B * H
    bf16, f32 = jnp.bfloat16, jnp.float32

    @pl.when(pl.program_id(0) == 0)
    def _():
        out_ref[...] = x_ref[...]

    x = out_ref[...]                                            # (B, N, D) f32

    # ---------------- PreNorm + multi-head self-attention (project_out=True) ----
    xn = _layernorm(x, g1_ref[0], be1_ref[0]).astype(bf16)      # (B, N, D)

    # Fused head-major q|k|v projection: one batched matmul over g = (b, h).
    xn_g = jnp.broadcast_to(xn[:, None], (B, H, N, D)).reshape(G, N, D)
    w_g = jnp.broadcast_to(wqkv_ref[0][None], (B, H, D, 3 * dh)).reshape(G, D, 3 * dh)
    qkv = jnp.einsum('gnd,gde->gne', xn_g, w_g,
                     preferred_element_type=f32)                # (G, N, 3*dh)
    q = qkv[:, :, 0 * dh:1 * dh].astype(bf16)   # 1/sqrt(dh) already folded into Wq
    k = qkv[:, :, 1 * dh:2 * dh].astype(bf16)
    v = qkv[:, :, 2 * dh:3 * dh].astype(bf16)

    dots = jnp.einsum('gnd,gmd->gnm', q, k,
                      preferred_element_type=f32)               # (G, N, N)
    dots = dots + bias_ref[...].reshape(G, N, N)                # attn_bias
    dots = dots - jnp.max(dots, axis=-1, keepdims=True)
    p = jnp.exp(dots)
    attn = p * pl.reciprocal(jnp.sum(p, axis=-1, keepdims=True), approx=True)

    ctx = jnp.einsum('gnm,gmd->gnd', attn.astype(bf16), v,
                     preferred_element_type=f32)                # (G, N, dh)

    # Per-head output projection, summed over heads (== concat(heads) @ Wo).
    wo_g = jnp.broadcast_to(wo_ref[0][None], (B, H, dh, D)).reshape(G, dh, D)
    proj_g = jnp.einsum('gnd,gde->gne', ctx.astype(bf16), wo_g,
                        preferred_element_type=f32)             # (G, N, D)
    proj4 = proj_g.reshape(B, H, N, D)
    proj = proj4[:, 0]
    for h in range(1, H):                                       # H-1 cheap vreg adds
        proj = proj + proj4[:, h]
    proj = proj + bo_ref[0]

    x = proj + x                                                # residual 1

    # ---------------- PreNorm + FeedForward ------------------------------------
    xn2 = _layernorm(x, g2_ref[0], be2_ref[0])
    xf = xn2.reshape(B * N, D).astype(bf16)
    hid = _gelu_tanh(jnp.dot(xf, w1_ref[0], preferred_element_type=f32) + b1_ref[0])
    ff = jnp.dot(hid.astype(bf16), w2_ref[0], preferred_element_type=f32) + b2_ref[0]
    out_ref[...] = ff.reshape(B, N, D) + x                      # residual 2


def _pack_layer(p, heads, dim_head):
    """Repack one layer's params: fuse q|k|v head-major, fold the attention scale
    into Wq, split Wo per head, and cast the matmul weights to bf16."""
    g1, be1, wq, wk, wv, wo, bo, g2, be2, w1, bb1, w2, bb2 = p
    D = wq.shape[0]
    H, dh = heads, dim_head
    wq = wq * (dh ** -0.5)                                      # fold softmax scale
    wqkv = jnp.concatenate([wq.reshape(D, H, dh),
                            wk.reshape(D, H, dh),
                            wv.reshape(D, H, dh)], axis=-1)     # (D, H, 3*dh)
    wqkv = jnp.transpose(wqkv, (1, 0, 2)).astype(jnp.bfloat16)  # (H, D, 3*dh)
    wo_h = wo.reshape(H, dh, -1).astype(jnp.bfloat16)           # (H, dh, D)
    return (g1, be1, wqkv, wo_h, bo, g2, be2,
            w1.astype(jnp.bfloat16), bb1, w2.astype(jnp.bfloat16), bb2)


def transformer_encoder(x, attn_bias, layer_params, *, heads, dim_head):
    """Fused Pallas forward of TransformerEncoder (dropout=0.0, return_attn=False)."""
    B, N, D = x.shape
    H, dh = heads, dim_head
    L = len(layer_params)

    packed = [_pack_layer(p, heads, dim_head) for p in layer_params]
    n_par = len(packed[0])
    stacked = [jnp.stack([packed[l][i] for l in range(L)], axis=0)  # leading layer axis
               for i in range(n_par)]

    def param_spec(arr):
        nd = arr.ndim
        return pl.BlockSpec((1,) + arr.shape[1:],
                            lambda l, _n=nd: (l,) + (0,) * (_n - 1))

    in_specs = [
        pl.BlockSpec((B, N, D), lambda l: (0, 0, 0)),            # x (fetched once)
        pl.BlockSpec((B, H, N, N), lambda l: (0, 0, 0, 0)),      # attn_bias (resident)
    ] + [param_spec(a) for a in stacked]

    kernel = functools.partial(encoder_kernel, heads=H, dim_head=dh)
    return pl.pallas_call(
        kernel,
        out_shape=jax.ShapeDtypeStruct((B, N, D), jnp.float32),
        grid=(L,),
        in_specs=in_specs,
        out_specs=pl.BlockSpec((B, N, D), lambda l: (0, 0, 0)),  # resident accumulator
        compiler_params=pltpu.CompilerParams(dimension_semantics=("arbitrary",)),
    )(x, attn_bias, *stacked)


# ---------------- pure-JAX f32 reference (for correctness check) ----------------
def _ref_layer(x, bias, p, heads, dim_head):
    g1, be1, wq, wk, wv, wo, bo, g2, be2, w1, bb1, w2, bb2 = p
    B, N, D = x.shape
    xn = _layernorm(x, g1, be1)
    q = (xn @ wq).reshape(B, N, heads, dim_head).transpose(0, 2, 1, 3)
    k = (xn @ wk).reshape(B, N, heads, dim_head).transpose(0, 2, 1, 3)
    v = (xn @ wv).reshape(B, N, heads, dim_head).transpose(0, 2, 1, 3)
    dots = jnp.einsum('bhid,bhjd->bhij', q, k) * dim_head ** -0.5 + bias
    attn = jax.nn.softmax(dots, axis=-1)
    out = jnp.einsum('bhij,bhjd->bhid', attn, v).transpose(0, 2, 1, 3).reshape(B, N, heads * dim_head)
    x = out @ wo + bo + x
    xn2 = _layernorm(x, g2, be2)
    hid = _gelu_tanh(xn2 @ w1 + bb1)
    return hid @ w2 + bb2 + x


def _ref_encoder(x, bias, layer_params, heads, dim_head):
    for p in layer_params:
        x = _ref_layer(x, bias, p, heads, dim_head)
    return x


# ---------------- parameter construction (deterministic, synthetic) ----------------
def make_layer_params(key, dim, heads, dim_head, mlp_dim):
    inner = heads * dim_head
    ks = jax.random.split(key, 8)
    s = 0.05
    g1 = jnp.ones((1, dim), jnp.float32)
    be1 = jnp.zeros((1, dim), jnp.float32)
    wq = s * jax.random.normal(ks[0], (dim, inner), jnp.float32)
    wk = s * jax.random.normal(ks[1], (dim, inner), jnp.float32)
    wv = s * jax.random.normal(ks[2], (dim, inner), jnp.float32)
    wo = s * jax.random.normal(ks[3], (inner, dim), jnp.float32)
    bo = s * jax.random.normal(ks[4], (1, dim), jnp.float32)
    g2 = jnp.ones((1, dim), jnp.float32)
    be2 = jnp.zeros((1, dim), jnp.float32)
    w1 = s * jax.random.normal(ks[5], (dim, mlp_dim), jnp.float32)
    bb1 = s * jax.random.normal(ks[6], (1, mlp_dim), jnp.float32)
    w2 = s * jax.random.normal(ks[7], (mlp_dim, dim), jnp.float32)
    bb2 = jnp.zeros((1, dim), jnp.float32)
    return (g1, be1, wq, wk, wv, wo, bo, g2, be2, w1, bb1, w2, bb2)


if __name__ == "__main__":
    B, N = 2, 8                      # batch, sequence length
    dim, heads, dim_head = 32, 4, 8  # embed dim, heads, per-head dim
    mlp_dim, depth = 64, 2

    key = jax.random.PRNGKey(0)
    kx, kb, kp = jax.random.split(key, 3)
    x = jax.random.normal(kx, (B, N, dim), jnp.float32)
    attn_bias = 0.1 * jax.random.normal(kb, (B, heads, N, N), jnp.float32)

    layer_params = [make_layer_params(k, dim, heads, dim_head, mlp_dim)
                    for k in jax.random.split(kp, depth)]

    out = transformer_encoder(x, attn_bias, layer_params, heads=heads, dim_head=dim_head)
    out = jax.block_until_ready(out)

    ref = _ref_encoder(x, attn_bias, layer_params, heads, dim_head)
    assert out.shape == (B, N, dim)
    err = float(jnp.max(jnp.abs(out - ref)))
    # bf16 MXU operands + approx-reciprocal softmax vs. pure-f32 reference => looser tol.
    assert jnp.allclose(out, ref, atol=2e-2, rtol=2e-2), f"max abs err {err}"

    print("KERNEL_OK")
</pallas_src>

<mosaic_0001>
module attributes {stable_mosaic.version = 11 : i64} {
  func.func @encoder_kernel(%arg0: i32, %arg1: memref<2x8x32xf32, #tpu.memory_space<vmem>>, %arg2: memref<2x4x8x8xf32, #tpu.memory_space<vmem>>, %arg3: memref<1x1x32xf32, #tpu.memory_space<vmem>>, %arg4: memref<1x1x32xf32, #tpu.memory_space<vmem>>, %arg5: memref<1x4x32x24xbf16, #tpu.memory_space<vmem>>, %arg6: memref<1x4x8x32xbf16, #tpu.memory_space<vmem>>, %arg7: memref<1x1x32xf32, #tpu.memory_space<vmem>>, %arg8: memref<1x1x32xf32, #tpu.memory_space<vmem>>, %arg9: memref<1x1x32xf32, #tpu.memory_space<vmem>>, %arg10: memref<1x32x64xbf16, #tpu.memory_space<vmem>>, %arg11: memref<1x1x64xf32, #tpu.memory_space<vmem>>, %arg12: memref<1x64x32xbf16, #tpu.memory_space<vmem>>, %arg13: memref<1x1x32xf32, #tpu.memory_space<vmem>>, %arg14: memref<2x8x32xf32, #tpu.memory_space<vmem>>) attributes {dimension_semantics = [#tpu.dimension_semantics<arbitrary>], iteration_bounds = array<i64: 2>, scalar_prefetch = 0 : i64, scratch_operands = 0 : i64, tpu.core_type = #tpu.core_type<tc>, window_params = [{pipeline_mode = #tpu.pipeline_mode<synchronous>, transform_indices = @transform_0, window_bounds = array<i64: 2, 8, 32>}, {pipeline_mode = #tpu.pipeline_mode<synchronous>, transform_indices = @transform_1, window_bounds = array<i64: 2, 4, 8, 8>}, {transform_indices = @transform_2, window_bounds = array<i64: 1, 1, 32>}, {transform_indices = @transform_3, window_bounds = array<i64: 1, 1, 32>}, {transform_indices = @transform_4, window_bounds = array<i64: 1, 4, 32, 24>}, {transform_indices = @transform_5, window_bounds = array<i64: 1, 4, 8, 32>}, {transform_indices = @transform_6, window_bounds = array<i64: 1, 1, 32>}, {transform_indices = @transform_7, window_bounds = array<i64: 1, 1, 32>}, {transform_indices = @transform_8, window_bounds = array<i64: 1, 1, 32>}, {transform_indices = @transform_9, window_bounds = array<i64: 1, 32, 64>}, {transform_indices = @transform_10, window_bounds = array<i64: 1, 1, 64>}, {transform_indices = @transform_11, window_bounds = array<i64: 1, 64, 32>}, {transform_indices = @transform_12, window_bounds = array<i64: 1, 1, 32>}, {pipeline_mode = #tpu.pipeline_mode<synchronous>, transform_indices = @transform_13, window_bounds = array<i64: 2, 8, 32>}]} {
    %c0_i32 = arith.constant 0 : i32
    %0 = arith.cmpi eq, %arg0, %c0_i32 : i32
    %1 = arith.extui %0 : i1 to i32
    %c0_i32_0 = arith.constant 0 : i32
    %2 = arith.cmpi ne, %1, %c0_i32_0 : i32
    scf.if %2 {
      %c0_66 = arith.constant 0 : index
      %c0_67 = arith.constant 0 : index
      %c0_68 = arith.constant 0 : index
      %153 = vector.load %arg1[%c0_66, %c0_67, %c0_68] : memref<2x8x32xf32, #tpu.memory_space<vmem>>, vector<2x8x32xf32>
      %c0_69 = arith.constant 0 : index
      %c0_70 = arith.constant 0 : index
      %c0_71 = arith.constant 0 : index
      %154 = vector.load %arg14[%c0_69, %c0_70, %c0_71] : memref<2x8x32xf32, #tpu.memory_space<vmem>>, vector<2x8x32xf32>
      tpu.vector_store %arg14[%c0_69, %c0_70, %c0_71], %153 {strides = array<i32>} : memref<2x8x32xf32, #tpu.memory_space<vmem>>, vector<2x8x32xf32>,
    } else {
    }
    %c0 = arith.constant 0 : index
    %c0_1 = arith.constant 0 : index
    %c0_2 = arith.constant 0 : index
    %3 = vector.load %arg14[%c0, %c0_1, %c0_2] : memref<2x8x32xf32, #tpu.memory_space<vmem>>, vector<2x8x32xf32>
    %c0_3 = arith.constant 0 : index
    %c0_4 = arith.constant 0 : index
    %c0_5 = arith.constant 0 : index
    %4 = vector.load %arg3[%c0_3, %c0_4, %c0_5] : memref<1x1x32xf32, #tpu.memory_space<vmem>>, vector<1x1x32xf32>
    %5 = vector.shape_cast %4 : vector<1x1x32xf32> to vector<1x32xf32>
    %c0_6 = arith.constant 0 : index
    %c0_7 = arith.constant 0 : index
    %c0_8 = arith.constant 0 : index
    %6 = vector.load %arg4[%c0_6, %c0_7, %c0_8] : memref<1x1x32xf32, #tpu.memory_space<vmem>>, vector<1x1x32xf32>
    %7 = vector.shape_cast %6 : vector<1x1x32xf32> to vector<1x32xf32>
    %cst = arith.constant dense<0.000000e+00> : vector<2x8xf32>
    %8 = vector.multi_reduction <add>, %3, %cst [2] : vector<2x8x32xf32> to vector<2x8xf32>
    %9 = vector.shape_cast %8 : vector<2x8xf32> to vector<2x8x1xf32>
    %cst_9 = arith.constant 3.200000e+01 : f32
    %10 = vector.broadcast %cst_9 : f32 to vector<2x8x1xf32>
    %11 = arith.divf %9, %10 : vector<2x8x1xf32>
    %12 = vector.broadcast %11 : vector<2x8x1xf32> to vector<2x8x32xf32>
    %13 = arith.subf %3, %12 : vector<2x8x32xf32>
    %14 = arith.mulf %13, %13 : vector<2x8x32xf32>
    %cst_10 = arith.constant dense<0.000000e+00> : vector<2x8xf32>
    %15 = vector.multi_reduction <add>, %14, %cst_10 [2] : vector<2x8x32xf32> to vector<2x8xf32>
    %16 = vector.shape_cast %15 : vector<2x8xf32> to vector<2x8x1xf32>
    %cst_11 = arith.constant 3.200000e+01 : f32
    %17 = vector.broadcast %cst_11 : f32 to vector<2x8x1xf32>
    %18 = arith.divf %16, %17 : vector<2x8x1xf32>
    %19 = vector.broadcast %11 : vector<2x8x1xf32> to vector<2x8x32xf32>
    %20 = arith.subf %3, %19 : vector<2x8x32xf32>
    %cst_12 = arith.constant 9.99999974E-6 : f32
    %21 = vector.broadcast %cst_12 : f32 to vector<2x8x1xf32>
    %22 = arith.addf %18, %21 : vector<2x8x1xf32>
    %23 = math.rsqrt %22 : vector<2x8x1xf32>
    %24 = vector.broadcast %23 : vector<2x8x1xf32> to vector<2x8x32xf32>
    %25 = arith.mulf %20, %24 : vector<2x8x32xf32>
    %26 = vector.shape_cast %5 : vector<1x32xf32> to vector<1x1x32xf32>
    %27 = vector.broadcast %26 : vector<1x1x32xf32> to vector<2x8x32xf32>
    %28 = arith.mulf %25, %27 : vector<2x8x32xf32>
    %29 = vector.shape_cast %7 : vector<1x32xf32> to vector<1x1x32xf32>
    %30 = vector.broadcast %29 : vector<1x1x32xf32> to vector<2x8x32xf32>
    %31 = arith.addf %28, %30 : vector<2x8x32xf32>
    %32 = arith.truncf %31 : vector<2x8x32xf32> to vector<2x8x32xbf16>
    %33 = vector.shape_cast %32 : vector<2x8x32xbf16> to vector<2x1x8x32xbf16>
    %34 = vector.shape_cast %33 : vector<2x1x8x32xbf16> to vector<2x1x8x32xbf16>
    %35 = vector.broadcast %34 : vector<2x1x8x32xbf16> to vector<2x4x8x32xbf16>
    %36 = vector.shape_cast %35 : vector<2x4x8x32xbf16> to vector<8x8x32xbf16>
    %c0_13 = arith.constant 0 : index
    %c0_14 = arith.constant 0 : index
    %c0_15 = arith.constant 0 : index
    %c0_16 = arith.constant 0 : index
    %37 = vector.load %arg5[%c0_13, %c0_14, %c0_15, %c0_16] : memref<1x4x32x24xbf16, #tpu.memory_space<vmem>>, vector<1x4x32x24xbf16>
    %38 = vector.shape_cast %37 : vector<1x4x32x24xbf16> to vector<4x32x24xbf16>
    %39 = vector.shape_cast %38 : vector<4x32x24xbf16> to vector<1x4x32x24xbf16>
    %40 = vector.shape_cast %39 : vector<1x4x32x24xbf16> to vector<1x4x32x24xbf16>
    %41 = vector.broadcast %40 : vector<1x4x32x24xbf16> to vector<2x4x32x24xbf16>
    %42 = vector.shape_cast %41 : vector<2x4x32x24xbf16> to vector<8x32x24xbf16>
    "tpu.trace_start"() <{level = 10 : i32, message = "gnd,gde->gne"}> : () -> ()
    %cst_17 = arith.constant dense<0.000000e+00> : vector<8x8x24xf32>
    %43 = tpu.matmul %36, %42, %cst_17 {dimension_numbers = #tpu.dot_dimension_numbers<[2], [1], [1], [2], [0, 0, 0, 1, 1, 2], [0], [0]>} : vector<8x8x32xbf16>, vector<8x32x24xbf16>, vector<8x8x24xf32> -> vector<8x8x24xf32>
    "tpu.trace_stop"() : () -> ()
    %44 = vector.extract_strided_slice %43 {offsets = [0, 0, 0], sizes = [8, 8, 8], strides = [1, 1, 1]} : vector<8x8x24xf32> to vector<8x8x8xf32>
    %45 = arith.truncf %44 : vector<8x8x8xf32> to vector<8x8x8xbf16>
    %46 = vector.extract_strided_slice %43 {offsets = [0, 0, 8], sizes = [8, 8, 8], strides = [1, 1, 1]} : vector<8x8x24xf32> to vector<8x8x8xf32>
    %47 = arith.truncf %46 : vector<8x8x8xf32> to vector<8x8x8xbf16>
    %48 = vector.extract_strided_slice %43 {offsets = [0, 0, 16], sizes = [8, 8, 8], strides = [1, 1, 1]} : vector<8x8x24xf32> to vector<8x8x8xf32>
    %49 = arith.truncf %48 : vector<8x8x8xf32> to vector<8x8x8xbf16>
    "tpu.trace_start"() <{level = 10 : i32, message = "gnd,gmd->gnm"}> : () -> ()
    %cst_18 = arith.constant dense<0.000000e+00> : vector<8x8x8xf32>
    %50 = tpu.matmul %45, %47, %cst_18 {dimension_numbers = #tpu.dot_dimension_numbers<[2], [2], [1], [1], [0, 0, 0, 1, 1, 1], [0], [0]>} : vector<8x8x8xbf16>, vector<8x8x8xbf16>, vector<8x8x8xf32> -> vector<8x8x8xf32>
    "tpu.trace_stop"() : () -> ()
    %c0_19 = arith.constant 0 : index
    %c0_20 = arith.constant 0 : index
    %c0_21 = arith.constant 0 : index
    %c0_22 = arith.constant 0 : index
    %51 = vector.load %arg2[%c0_19, %c0_20, %c0_21, %c0_22] : memref<2x4x8x8xf32, #tpu.memory_space<vmem>>, vector<2x4x8x8xf32>
    %52 = vector.shape_cast %51 : vector<2x4x8x8xf32> to vector<8x8x8xf32>
    %53 = arith.addf %50, %52 : vector<8x8x8xf32>
    %cst_23 = arith.constant dense<0xFF800000> : vector<8x8xf32>
    %54 = vector.multi_reduction <maximumf>, %53, %cst_23 [2] : vector<8x8x8xf32> to vector<8x8xf32>
    %55 = vector.shape_cast %54 : vector<8x8xf32> to vector<8x8x1xf32>
    %56 = vector.broadcast %55 : vector<8x8x1xf32> to vector<8x8x8xf32>
    %57 = arith.subf %53, %56 : vector<8x8x8xf32>
    %58 = math.exp %57 : vector<8x8x8xf32>
    %cst_24 = arith.constant dense<0.000000e+00> : vector<8x8xf32>
    %59 = vector.multi_reduction <add>, %58, %cst_24 [2] : vector<8x8x8xf32> to vector<8x8xf32>
    %60 = vector.shape_cast %59 : vector<8x8xf32> to vector<8x8x1xf32>
    %61 = tpu.reciprocal %60 {approx = true} : vector<8x8x1xf32> -> vector<8x8x1xf32>
    %62 = vector.broadcast %61 : vector<8x8x1xf32> to vector<8x8x8xf32>
    %63 = arith.mulf %58, %62 : vector<8x8x8xf32>
    %64 = arith.truncf %63 : vector<8x8x8xf32> to vector<8x8x8xbf16>
    "tpu.trace_start"() <{level = 10 : i32, message = "gnm,gmd->gnd"}> : () -> ()
    %cst_25 = arith.constant dense<0.000000e+00> : vector<8x8x8xf32>
    %65 = tpu.matmul %64, %49, %cst_25 {dimension_numbers = #tpu.dot_dimension_numbers<[2], [1], [1], [2], [0, 0, 0, 1, 1, 2], [0], [0]>} : vector<8x8x8xbf16>, vector<8x8x8xbf16>, vector<8x8x8xf32> -> vector<8x8x8xf32>
    "tpu.trace_stop"() : () -> ()
    %c0_26 = arith.constant 0 : index
    %c0_27 = arith.constant 0 : index
    %c0_28 = arith.constant 0 : index
    %c0_29 = arith.constant 0 : index
    %66 = vector.load %arg6[%c0_26, %c0_27, %c0_28, %c0_29] : memref<1x4x8x32xbf16, #tpu.memory_space<vmem>>, vector<1x4x8x32xbf16>
    %67 = vector.shape_cast %66 : vector<1x4x8x32xbf16> to vector<4x8x32xbf16>
    %68 = vector.shape_cast %67 : vector<4x8x32xbf16> to vector<1x4x8x32xbf16>
    %69 = vector.shape_cast %68 : vector<1x4x8x32xbf16> to vector<1x4x8x32xbf16>
    %70 = vector.broadcast %69 : vector<1x4x8x32xbf16> to vector<2x4x8x32xbf16>
    %71 = vector.shape_cast %70 : vector<2x4x8x32xbf16> to vector<8x8x32xbf16>
    %72 = arith.truncf %65 : vector<8x8x8xf32> to vector<8x8x8xbf16>
    "tpu.trace_start"() <{level = 10 : i32, message = "gnd,gde->gne"}> : () -> ()
    %cst_30 = arith.constant dense<0.000000e+00> : vector<8x8x32xf32>
    %73 = tpu.matmul %72, %71, %cst_30 {dimension_numbers = #tpu.dot_dimension_numbers<[2], [1], [1], [2], [0, 0, 0, 1, 1, 2], [0], [0]>} : vector<8x8x8xbf16>, vector<8x8x32xbf16>, vector<8x8x32xf32> -> vector<8x8x32xf32>
    "tpu.trace_stop"() : () -> ()
    %74 = vector.shape_cast %73 : vector<8x8x32xf32> to vector<2x4x8x32xf32>
    %75 = vector.extract_strided_slice %74 {offsets = [0, 0, 0, 0], sizes = [2, 1, 8, 32], strides = [1, 1, 1, 1]} : vector<2x4x8x32xf32> to vector<2x1x8x32xf32>
    %76 = vector.shape_cast %75 : vector<2x1x8x32xf32> to vector<2x8x32xf32>
    %77 = vector.extract_strided_slice %74 {offsets = [0, 1, 0, 0], sizes = [2, 1, 8, 32], strides = [1, 1, 1, 1]} : vector<2x4x8x32xf32> to vector<2x1x8x32xf32>
    %78 = vector.shape_cast %77 : vector<2x1x8x32xf32> to vector<2x8x32xf32>
    %79 = arith.addf %76, %78 : vector<2x8x32xf32>
    %80 = vector.extract_strided_slice %74 {offsets = [0, 2, 0, 0], sizes = [2, 1, 8, 32], strides = [1, 1, 1, 1]} : vector<2x4x8x32xf32> to vector<2x1x8x32xf32>
    %81 = vector.shape_cast %80 : vector<2x1x8x32xf32> to vector<2x8x32xf32>
    %82 = arith.addf %79, %81 : vector<2x8x32xf32>
    %83 = vector.extract_strided_slice %74 {offsets = [0, 3, 0, 0], sizes = [2, 1, 8, 32], strides = [1, 1, 1, 1]} : vector<2x4x8x32xf32> to vector<2x1x8x32xf32>
    %84 = vector.shape_cast %83 : vector<2x1x8x32xf32> to vector<2x8x32xf32>
    %85 = arith.addf %82, %84 : vector<2x8x32xf32>
    %c0_31 = arith.constant 0 : index
    %c0_32 = arith.constant 0 : index
    %c0_33 = arith.constant 0 : index
    %86 = vector.load %arg7[%c0_31, %c0_32, %c0_33] : memref<1x1x32xf32, #tpu.memory_space<vmem>>, vector<1x1x32xf32>
    %87 = vector.shape_cast %86 : vector<1x1x32xf32> to vector<1x32xf32>
    %88 = vector.shape_cast %87 : vector<1x32xf32> to vector<1x1x32xf32>
    %89 = vector.broadcast %88 : vector<1x1x32xf32> to vector<2x8x32xf32>
    %90 = arith.addf %85, %89 : vector<2x8x32xf32>
    %91 = arith.addf %90, %3 : vector<2x8x32xf32>
    %c0_34 = arith.constant 0 : index
    %c0_35 = arith.constant 0 : index
    %c0_36 = arith.constant 0 : index
    %92 = vector.load %arg8[%c0_34, %c0_35, %c0_36] : memref<1x1x32xf32, #tpu.memory_space<vmem>>, vector<1x1x32xf32>
    %93 = vector.shape_cast %92 : vector<1x1x32xf32> to vector<1x32xf32>
    %c0_37 = arith.constant 0 : index
    %c0_38 = arith.constant 0 : index
    %c0_39 = arith.constant 0 : index
    %94 = vector.load %arg9[%c0_37, %c0_38, %c0_39] : memref<1x1x32xf32, #tpu.memory_space<vmem>>, vector<1x1x32xf32>
    %95 = vector.shape_cast %94 : vector<1x1x32xf32> to vector<1x32xf32>
    %cst_40 = arith.constant dense<0.000000e+00> : vector<2x8xf32>
    %96 = vector.multi_reduction <add>, %91, %cst_40 [2] : vector<2x8x32xf32> to vector<2x8xf32>
    %97 = vector.shape_cast %96 : vector<2x8xf32> to vector<2x8x1xf32>
    %cst_41 = arith.constant 3.200000e+01 : f32
    %98 = vector.broadcast %cst_41 : f32 to vector<2x8x1xf32>
    %99 = arith.divf %97, %98 : vector<2x8x1xf32>
    %100 = vector.broadcast %99 : vector<2x8x1xf32> to vector<2x8x32xf32>
    %101 = arith.subf %91, %100 : vector<2x8x32xf32>
    %102 = arith.mulf %101, %101 : vector<2x8x32xf32>
    %cst_42 = arith.constant dense<0.000000e+00> : vector<2x8xf32>
    %103 = vector.multi_reduction <add>, %102, %cst_42 [2] : vector<2x8x32xf32> to vector<2x8xf32>
    %104 = vector.shape_cast %103 : vector<2x8xf32> to vector<2x8x1xf32>
    %cst_43 = arith.constant 3.200000e+01 : f32
    %105 = vector.broadcast %cst_43 : f32 to vector<2x8x1xf32>
    %106 = arith.divf %104, %105 : vector<2x8x1xf32>
    %107 = vector.broadcast %99 : vector<2x8x1xf32> to vector<2x8x32xf32>
    %108 = arith.subf %91, %107 : vector<2x8x32xf32>
    %cst_44 = arith.constant 9.99999974E-6 : f32
    %109 = vector.broadcast %cst_44 : f32 to vector<2x8x1xf32>
    %110 = arith.addf %106, %109 : vector<2x8x1xf32>
    %111 = math.rsqrt %110 : vector<2x8x1xf32>
    %112 = vector.broadcast %111 : vector<2x8x1xf32> to vector<2x8x32xf32>
    %113 = arith.mulf %108, %112 : vector<2x8x32xf32>
    %114 = vector.shape_cast %93 : vector<1x32xf32> to vector<1x1x32xf32>
    %115 = vector.broadcast %114 : vector<1x1x32xf32> to vector<2x8x32xf32>
    %116 = arith.mulf %113, %115 : vector<2x8x32xf32>
    %117 = vector.shape_cast %95 : vector<1x32xf32> to vector<1x1x32xf32>
    %118 = vector.broadcast %117 : vector<1x1x32xf32> to vector<2x8x32xf32>
    %119 = arith.addf %116, %118 : vector<2x8x32xf32>
    %120 = vector.shape_cast %119 : vector<2x8x32xf32> to vector<16x32xf32>
    %121 = arith.truncf %120 : vector<16x32xf32> to vector<16x32xbf16>
    %c0_45 = arith.constant 0 : index
    %c0_46 = arith.constant 0 : index
    %c0_47 = arith.constant 0 : index
    %122 = vector.load %arg10[%c0_45, %c0_46, %c0_47] : memref<1x32x64xbf16, #tpu.memory_space<vmem>>, vector<1x32x64xbf16>
    %123 = vector.shape_cast %122 : vector<1x32x64xbf16> to vector<32x64xbf16>
    %cst_48 = arith.constant dense<0.000000e+00> : vector<16x64xf32>
    %124 = tpu.matmul %121, %123, %cst_48 {dimension_numbers = #tpu.dot_dimension_numbers<[1], [0], [0], [1], [0, 0, 1, 1], [], []>} : vector<16x32xbf16>, vector<32x64xbf16>, vector<16x64xf32> -> vector<16x64xf32>
    %c0_49 = arith.constant 0 : index
    %c0_50 = arith.constant 0 : index
    %c0_51 = arith.constant 0 : index
    %125 = vector.load %arg11[%c0_49, %c0_50, %c0_51] : memref<1x1x64xf32, #tpu.memory_space<vmem>>, vector<1x1x64xf32>
    %126 = vector.shape_cast %125 : vector<1x1x64xf32> to vector<1x64xf32>
    %127 = vector.broadcast %126 : vector<1x64xf32> to vector<16x64xf32>
    %128 = arith.addf %124, %127 : vector<16x64xf32>
    %cst_52 = arith.constant 5.000000e-01 : f32
    %129 = vector.broadcast %cst_52 : f32 to vector<16x64xf32>
    %130 = arith.mulf %129, %128 : vector<16x64xf32>
    %cst_53 = arith.constant 4.471500e-02 : f32
    %131 = vector.broadcast %cst_53 : f32 to vector<16x64xf32>
    %132 = arith.mulf %131, %128 : vector<16x64xf32>
    %133 = arith.mulf %132, %128 : vector<16x64xf32>
    %134 = arith.mulf %133, %128 : vector<16x64xf32>
    %135 = arith.addf %128, %134 : vector<16x64xf32>
    %cst_54 = arith.constant 0.797884583 : f32
    %136 = vector.broadcast %cst_54 : f32 to vector<16x64xf32>
    %137 = arith.mulf %136, %135 : vector<16x64xf32>
    %138 = math.tanh %137 : vector<16x64xf32>
    %cst_55 = arith.constant 1.000000e+00 : f32
    %139 = vector.broadcast %cst_55 : f32 to vector<16x64xf32>
    %140 = arith.addf %139, %138 : vector<16x64xf32>
    %141 = arith.mulf %130, %140 : vector<16x64xf32>
    %142 = arith.truncf %141 : vector<16x64xf32> to vector<16x64xbf16>
    %c0_56 = arith.constant 0 : index
    %c0_57 = arith.constant 0 : index
    %c0_58 = arith.constant 0 : index
    %143 = vector.load %arg12[%c0_56, %c0_57, %c0_58] : memref<1x64x32xbf16, #tpu.memory_space<vmem>>, vector<1x64x32xbf16>
    %144 = vector.shape_cast %143 : vector<1x64x32xbf16> to vector<64x32xbf16>
    %cst_59 = arith.constant dense<0.000000e+00> : vector<16x32xf32>
    %145 = tpu.matmul %142, %144, %cst_59 {dimension_numbers = #tpu.dot_dimension_numbers<[1], [0], [0], [1], [0, 0, 1, 1], [], []>} : vector<16x64xbf16>, vector<64x32xbf16>, vector<16x32xf32> -> vector<16x32xf32>
    %c0_60 = arith.constant 0 : index
    %c0_61 = arith.constant 0 : index
    %c0_62 = arith.constant 0 : index
    %146 = vector.load %arg13[%c0_60, %c0_61, %c0_62] : memref<1x1x32xf32, #tpu.memory_space<vmem>>, vector<1x1x32xf32>
    %147 = vector.shape_cast %146 : vector<1x1x32xf32> to vector<1x32xf32>
    %148 = vector.broadcast %147 : vector<1x32xf32> to vector<16x32xf32>
    %149 = arith.addf %145, %148 : vector<16x32xf32>
    %150 = vector.shape_cast %149 : vector<16x32xf32> to vector<2x8x32xf32>
    %151 = arith.addf %150, %91 : vector<2x8x32xf32>
    %c0_63 = arith.constant 0 : index
    %c0_64 = arith.constant 0 : index
    %c0_65 = arith.constant 0 : index
    %152 = vector.load %arg14[%c0_63, %c0_64, %c0_65] : memref<2x8x32xf32, #tpu.memory_space<vmem>>, vector<2x8x32xf32>
    tpu.vector_store %arg14[%c0_63, %c0_64, %c0_65], %151 {strides = array<i32>} : memref<2x8x32xf32, #tpu.memory_space<vmem>>, vector<2x8x32xf32>,
    return
  }
  func.func @transform_0(%arg0: i32) -> (i32, i32, i32) {
    %c0_i32 = arith.constant 0 : i32
    %c0_i32_0 = arith.constant 0 : i32
    %c0_i32_1 = arith.constant 0 : i32
    %c0_i32_2 = arith.constant 0 : i32
    return %c0_i32, %c0_i32_0, %c0_i32_1 : i32, i32, i32
  }
  func.func @transform_1(%arg0: i32) -> (i32, i32, i32, i32) {
    %c0_i32 = arith.constant 0 : i32
    %c0_i32_0 = arith.constant 0 : i32
    %c0_i32_1 = arith.constant 0 : i32
    %c0_i32_2 = arith.constant 0 : i32
    %c0_i32_3 = arith.constant 0 : i32
    return %c0_i32, %c0_i32_0, %c0_i32_1, %c0_i32_2 : i32, i32, i32, i32
  }
  func.func @transform_2(%arg0: i32) -> (i32, i32, i32) {
    %c0_i32 = arith.constant 0 : i32
    %c0_i32_0 = arith.constant 0 : i32
    %c0_i32_1 = arith.constant 0 : i32
    return %arg0, %c0_i32, %c0_i32_0 : i32, i32, i32
  }
  func.func @transform_3(%arg0: i32) -> (i32, i32, i32) {
    %c0_i32 = arith.constant 0 : i32
    %c0_i32_0 = arith.constant 0 : i32
    %c0_i32_1 = arith.constant 0 : i32
    return %arg0, %c0_i32, %c0_i32_0 : i32, i32, i32
  }
  func.func @transform_4(%arg0: i32) -> (i32, i32, i32, i32) {
    %c0_i32 = arith.constant 0 : i32
    %c0_i32_0 = arith.constant 0 : i32
    %c0_i32_1 = arith.constant 0 : i32
    %c0_i32_2 = arith.constant 0 : i32
    return %arg0, %c0_i32, %c0_i32_0, %c0_i32_1 : i32, i32, i32, i32
  }
  func.func @transform_5(%arg0: i32) -> (i32, i32, i32, i32) {
    %c0_i32 = arith.constant 0 : i32
    %c0_i32_0 = arith.constant 0 : i32
    %c0_i32_1 = arith.constant 0 : i32
    %c0_i32_2 = arith.constant 0 : i32
    return %arg0, %c0_i32, %c0_i32_0, %c0_i32_1 : i32, i32, i32, i32
  }
  func.func @transform_6(%arg0: i32) -> (i32, i32, i32) {
    %c0_i32 = arith.constant 0 : i32
    %c0_i32_0 = arith.constant 0 : i32
    %c0_i32_1 = arith.constant 0 : i32
    return %arg0, %c0_i32, %c0_i32_0 : i32, i32, i32
  }
  func.func @transform_7(%arg0: i32) -> (i32, i32, i32) {
    %c0_i32 = arith.constant 0 : i32
    %c0_i32_0 = arith.constant 0 : i32
    %c0_i32_1 = arith.constant 0 : i32
    return %arg0, %c0_i32, %c0_i32_0 : i32, i32, i32
  }
  func.func @transform_8(%arg0: i32) -> (i32, i32, i32) {
    %c0_i32 = arith.constant 0 : i32
    %c0_i32_0 = arith.constant 0 : i32
    %c0_i32_1 = arith.constant 0 : i32
    return %arg0, %c0_i32, %c0_i32_0 : i32, i32, i32
  }
  func.func @transform_9(%arg0: i32) -> (i32, i32, i32) {
    %c0_i32 = arith.constant 0 : i32
    %c0_i32_0 = arith.constant 0 : i32
    %c0_i32_1 = arith.constant 0 : i32
    return %arg0, %c0_i32, %c0_i32_0 : i32, i32, i32
  }
  func.func @transform_10(%arg0: i32) -> (i32, i32, i32) {
    %c0_i32 = arith.constant 0 : i32
    %c0_i32_0 = arith.constant 0 : i32
    %c0_i32_1 = arith.constant 0 : i32
    return %arg0, %c0_i32, %c0_i32_0 : i32, i32, i32
  }
  func.func @transform_11(%arg0: i32) -> (i32, i32, i32) {
    %c0_i32 = arith.constant 0 : i32
    %c0_i32_0 = arith.constant 0 : i32
    %c0_i32_1 = arith.constant 0 : i32
    return %arg0, %c0_i32, %c0_i32_0 : i32, i32, i32
  }
  func.func @transform_12(%arg0: i32) -> (i32, i32, i32) {
    %c0_i32 = arith.constant 0 : i32
    %c0_i32_0 = arith.constant 0 : i32
    %c0_i32_1 = arith.constant 0 : i32
    return %arg0, %c0_i32, %c0_i32_0 : i32, i32, i32
  }
  func.func @transform_13(%arg0: i32) -> (i32, i32, i32) {
    %c0_i32 = arith.constant 0 : i32
    %c0_i32_0 = arith.constant 0 : i32
    %c0_i32_1 = arith.constant 0 : i32
    %c0_i32_2 = arith.constant 0 : i32
    return %c0_i32, %c0_i32_0, %c0_i32_1 : i32, i32, i32
  }
}

</mosaic_0001>

<llo_original>
// kernel: tpu_custom_call.1
$region0: #{tpu_custom_call.1}
  #allocation0 [shape = 'u32[]', space=smem, size = 0x4, offset = 0x4, fixed_abs, tag = 'smem constant byte address 0x4 - core index']
  #allocation1 [shape = 'u32[72,128]{1,0:T(1,128)}', space=vmem, size = 0x9000, scoped, tag = 'internal scratch']
  %s0 = inlined_call_operand.vmem [shape: f32[2,8,32], index: 0, kind: input, shape index: {}]
  %s1 = inlined_call_operand.vmem [shape: f32[2,4,8,8], index: 1, kind: input, shape index: {}]
  %s2 = inlined_call_operand.vmem [shape: f32[2,1,32], index: 2, kind: input, shape index: {}]
  %s3 = inlined_call_operand.vmem [shape: f32[2,1,32], index: 3, kind: input, shape index: {}]
  %s4 = inlined_call_operand.vmem [shape: bf16[2,4,32,24], index: 4, kind: input, shape index: {}]
  %s5 = inlined_call_operand.vmem [shape: bf16[2,4,8,32], index: 5, kind: input, shape index: {}]
  %s6 = inlined_call_operand.vmem [shape: f32[2,1,32], index: 6, kind: input, shape index: {}]
  %s7 = inlined_call_operand.vmem [shape: f32[2,1,32], index: 7, kind: input, shape index: {}]
  %s8 = inlined_call_operand.vmem [shape: f32[2,1,32], index: 8, kind: input, shape index: {}]
  %s9 = inlined_call_operand.vmem [shape: bf16[2,32,64], index: 9, kind: input, shape index: {}]
  %s10 = inlined_call_operand.vmem [shape: f32[2,1,64], index: 10, kind: input, shape index: {}]
  %s11 = inlined_call_operand.vmem [shape: bf16[2,64,32], index: 11, kind: input, shape index: {}]
  %s12 = inlined_call_operand.vmem [shape: f32[2,1,32], index: 12, kind: input, shape index: {}]
  %s13 = inlined_call_operand.hbm [shape: f32[2,8,32], index: 13, kind: output, shape index: {}]
  %s14 = sld [smem:[#allocation0]]
  $region89: #{tpu_custom_call.1} parent=0
    _
  %s16 = ssub.s32 1, %s14
  %s17 = scalar_select 0, %s16, %s14
  $region1: #{tpu_custom_call.1} parent=0
    #allocation2 [shape = 'u8[8192]{0}', space=vmem, size = 0x2000, scoped, tag = 'output window, operand 0, single buffered']
    #allocation3 [shape = 's32[2]{0}', space=sflag, size = 0x8, scoped, tag = 'scoped memory for tpu_custom_call.1']
    %18 = vsyncpa [#allocation3], 0
    loop: start=0, step=1, limit=4
    $region2: #{tpu_custom_call.1} parent=1 // loop_pre_header
      _
    $region3: #{tpu_custom_call.1} parent=1 // loop_header
      %s20 = sphi 0, %s24
      %p21 = scmp.ge.s32.totalorder %s20, 4
      %s28 = sphi 0, %s28
      %s30 = sphi 0, %s28
      %s31 = sphi 0, %s30
      %s45 = sphi 0, %s31
      %s49 = sphi 0, %s49
      %s51 = sphi 0, %s49
      %s52 = sphi 0, %s51
      %s66 = sphi 0, %s52
      %s72 = sphi 0, %s74
      %s75 = sphi 0, %s72
      %s76 = sphi 0, %s75
      %s92 = sphi 0, %s76
      %s98 = sphi 0, %s100
      %s101 = sphi 0, %s98
      %s102 = sphi 0, %s101
      %s118 = sphi 0, %s102
      %s124 = sphi 0, %s126
      %s127 = sphi 0, %s124
      %s128 = sphi 0, %s127
      %s144 = sphi 0, %s128
      %s150 = sphi 0, %s152
      %s153 = sphi 0, %s150
      %s154 = sphi 0, %s153
      %s170 = sphi 0, %s154
      %s176 = sphi 0, %s178
      %s179 = sphi 0, %s176
      %s180 = sphi 0, %s179
      %s196 = sphi 0, %s180
      %s202 = sphi 0, %s204
      %s205 = sphi 0, %s202
      %s206 = sphi 0, %s205
      %s222 = sphi 0, %s206
      %s228 = sphi 0, %s230
      %s231 = sphi 0, %s228
      %s232 = sphi 0, %s231
      %s248 = sphi 0, %s232
      %s254 = sphi 0, %s256
      %s257 = sphi 0, %s254
      %s258 = sphi 0, %s257
      %s274 = sphi 0, %s258
      %s280 = sphi 0, %s282
      %s283 = sphi 0, %s280
      %s284 = sphi 0, %s283
      %s300 = sphi 0, %s284
      %s306 = sphi 0, %s308
      %s309 = sphi 0, %s306
      %s310 = sphi 0, %s309
      %s326 = sphi 0, %s310
      %s332 = sphi 0, %s334
      %s335 = sphi 0, %s332
      %s336 = sphi 0, %s335
      %s352 = sphi 0, %s336
      %s356 = sphi 0, %s356
      %s358 = sphi 0, %s356
      %s359 = sphi 0, %s358
      %s373 = sphi 0, %s359
    $region4: #{tpu_custom_call.1} parent=1 // loop_header_branch
      %23 = sbr.rel (%p21) target = $region8
    $region5: #{tpu_custom_call.1} parent=1 // loop_body
      %s25 = ssub.s32 %s20, 1
      %s26 = ssub.s32 %s20, 2
      %s27 = sadd.s32 %s20, 1
      %s29 = sadd.s32 %s28, 1
      %p32 = scmp.eq.s32.totalorder %s20, 1
      %p33 = scmp.ne.s32.totalorder %s28, %s30
      %p34 = scmp.eq.s32.totalorder %s20, 0
      %p35 = por %p33, %p34
      %p36 = scmp.ne.s32.totalorder %s28, %s30
      %p37 = scmp.eq.s32.totalorder %s25, 1
      %p38 = por %p36, %p37
      %p39 = scmp.ne.s32.totalorder %s30, %s31
      %p40 = scmp.eq.s32.totalorder %s25, 0
      %p41 = por %p39, %p40
      %p42 = scmp.ne.s32.totalorder %s30, %s31
      %p43 = scmp.eq.s32.totalorder %s26, 1
      %p44 = por %p42, %p43
      %p46 = scmp.ne.s32.totalorder %s31, %s45
      %p47 = scmp.eq.s32.totalorder %s26, 0
      %p48 = por %p46, %p47
      %s50 = sadd.s32 %s49, 1
      %p53 = scmp.eq.s32.totalorder %s20, 1
      %p54 = scmp.ne.s32.totalorder %s49, %s51
      %p55 = scmp.eq.s32.totalorder %s20, 0
      %p56 = por %p54, %p55
      %p57 = scmp.ne.s32.totalorder %s49, %s51
      %p58 = scmp.eq.s32.totalorder %s25, 1
      %p59 = por %p57, %p58
      %p60 = scmp.ne.s32.totalorder %s51, %s52
      %p61 = scmp.eq.s32.totalorder %s25, 0
      %p62 = por %p60, %p61
      %p63 = scmp.ne.s32.totalorder %s51, %s52
      %p64 = scmp.eq.s32.totalorder %s26, 1
      %p65 = por %p63, %p64
      %p67 = scmp.ne.s32.totalorder %s52, %s66
      %p68 = scmp.eq.s32.totalorder %s26, 0
      %p69 = por %p67, %p68
      %s70 = ssub.s32 %s20, %s27
      %p71 = scmp.eq.s32.totalorder %s70, 0
      %s73 = sadd.s32 %s72, 1
      %s74 = scalar_select %p71, %s72, %s73
      %p77 = pneg %p71
      %p78 = scmp.eq.s32.totalorder %s20, 1
      %p79 = por %p77, %p78
      %p80 = scmp.ne.s32.totalorder %s72, %s75
      %p81 = scmp.eq.s32.totalorder %s20, 0
      %p82 = por %p80, %p81
      %p83 = scmp.ne.s32.totalorder %s72, %s75
      %p84 = scmp.eq.s32.totalorder %s25, 1
      %p85 = por %p83, %p84
      %p86 = scmp.ne.s32.totalorder %s75, %s76
      %p87 = scmp.eq.s32.totalorder %s25, 0
      %p88 = por %p86, %p87
      %p89 = scmp.ne.s32.totalorder %s75, %s76
      %p90 = scmp.eq.s32.totalorder %s26, 1
      %p91 = por %p89, %p90
      %p93 = scmp.ne.s32.totalorder %s76, %s92
      %p94 = scmp.eq.s32.totalorder %s26, 0
      %p95 = por %p93, %p94
      %s96 = ssub.s32 %s20, %s27
      %p97 = scmp.eq.s32.totalorder %s96, 0
      %s99 = sadd.s32 %s98, 1
      %s100 = scalar_select %p97, %s98, %s99
      %p103 = pneg %p97
      %p104 = scmp.eq.s32.totalorder %s20, 1
      %p105 = por %p103, %p104
      %p106 = scmp.ne.s32.totalorder %s98, %s101
      %p107 = scmp.eq.s32.totalorder %s20, 0
      %p108 = por %p106, %p107
      %p109 = scmp.ne.s32.totalorder %s98, %s101
      %p110 = scmp.eq.s32.totalorder %s25, 1
      %p111 = por %p109, %p110
      %p112 = scmp.ne.s32.totalorder %s101, %s102
      %p113 = scmp.eq.s32.totalorder %s25, 0
      %p114 = por %p112, %p113
      %p115 = scmp.ne.s32.totalorder %s101, %s102
      %p116 = scmp.eq.s32.totalorder %s26, 1
      %p117 = por %p115, %p116
      %p119 = scmp.ne.s32.totalorder %s102, %s118
      %p120 = scmp.eq.s32.totalorder %s26, 0
      %p121 = por %p119, %p120
      %s122 = ssub.s32 %s20, %s27
      %p123 = scmp.eq.s32.totalorder %s122, 0
      %s125 = sadd.s32 %s124, 1
      %s126 = scalar_select %p123, %s124, %s125
      %p129 = pneg %p123
      %p130 = scmp.eq.s32.totalorder %s20, 1
      %p131 = por %p129, %p130
      %p132 = scmp.ne.s32.totalorder %s124, %s127
      %p133 = scmp.eq.s32.totalorder %s20, 0
      %p134 = por %p132, %p133
      %p135 = scmp.ne.s32.totalorder %s124, %s127
      %p136 = scmp.eq.s32.totalorder %s25, 1
      %p137 = por %p135, %p136
      %p138 = scmp.ne.s32.totalorder %s127, %s128
      %p139 = scmp.eq.s32.totalorder %s25, 0
      %p140 = por %p138, %p139
      %p141 = scmp.ne.s32.totalorder %s127, %s128
      %p142 = scmp.eq.s32.totalorder %s26, 1
      %p143 = por %p141, %p142
      %p145 = scmp.ne.s32.totalorder %s128, %s144
      %p146 = scmp.eq.s32.totalorder %s26, 0
      %p147 = por %p145, %p146
      %s148 = ssub.s32 %s20, %s27
      %p149 = scmp.eq.s32.totalorder %s148, 0
      %s151 = sadd.s32 %s150, 1
      %s152 = scalar_select %p149, %s150, %s151
      %p155 = pneg %p149
      %p156 = scmp.eq.s32.totalorder %s20, 1
      %p157 = por %p155, %p156
      %p158 = scmp.ne.s32.totalorder %s150, %s153
      %p159 = scmp.eq.s32.totalorder %s20, 0
      %p160 = por %p158, %p159
      %p161 = scmp.ne.s32.totalorder %s150, %s153
      %p162 = scmp.eq.s32.totalorder %s25, 1
      %p163 = por %p161, %p162
      %p164 = scmp.ne.s32.totalorder %s153, %s154
      %p165 = scmp.eq.s32.totalorder %s25, 0
      %p166 = por %p164, %p165
      %p167 = scmp.ne.s32.totalorder %s153, %s154
      %p168 = scmp.eq.s32.totalorder %s26, 1
      %p169 = por %p167, %p168
      %p171 = scmp.ne.s32.totalorder %s154, %s170
      %p172 = scmp.eq.s32.totalorder %s26, 0
      %p173 = por %p171, %p172
      %s174 = ssub.s32 %s20, %s27
      %p175 = scmp.eq.s32.totalorder %s174, 0
      %s177 = sadd.s32 %s176, 1
      %s178 = scalar_select %p175, %s176, %s177
      %p181 = pneg %p175
      %p182 = scmp.eq.s32.totalorder %s20, 1
      %p183 = por %p181, %p182
      %p184 = scmp.ne.s32.totalorder %s176, %s179
      %p185 = scmp.eq.s32.totalorder %s20, 0
      %p186 = por %p184, %p185
      %p187 = scmp.ne.s32.totalorder %s176, %s179
      %p188 = scmp.eq.s32.totalorder %s25, 1
      %p189 = por %p187, %p188
      %p190 = scmp.ne.s32.totalorder %s179, %s180
      %p191 = scmp.eq.s32.totalorder %s25, 0
      %p192 = por %p190, %p191
      %p193 = scmp.ne.s32.totalorder %s179, %s180
      %p194 = scmp.eq.s32.totalorder %s26, 1
      %p195 = por %p193, %p194
      %p197 = scmp.ne.s32.totalorder %s180, %s196
      %p198 = scmp.eq.s32.totalorder %s26, 0
      %p199 = por %p197, %p198
      %s200 = ssub.s32 %s20, %s27
      %p201 = scmp.eq.s32.totalorder %s200, 0
      %s203 = sadd.s32 %s202, 1
      %s204 = scalar_select %p201, %s202, %s203
      %p207 = pneg %p201
      %p208 = scmp.eq.s32.totalorder %s20, 1
      %p209 = por %p207, %p208
      %p210 = scmp.ne.s32.totalorder %s202, %s205
      %p211 = scmp.eq.s32.totalorder %s20, 0
      %p212 = por %p210, %p211
      %p213 = scmp.ne.s32.totalorder %s202, %s205
      %p214 = scmp.eq.s32.totalorder %s25, 1
      %p215 = por %p213, %p214
      %p216 = scmp.ne.s32.totalorder %s205, %s206
      %p217 = scmp.eq.s32.totalorder %s25, 0
      %p218 = por %p216, %p217
      %p219 = scmp.ne.s32.totalorder %s205, %s206
      %p220 = scmp.eq.s32.totalorder %s26, 1
      %p221 = por %p219, %p220
      %p223 = scmp.ne.s32.totalorder %s206, %s222
      %p224 = scmp.eq.s32.totalorder %s26, 0
      %p225 = por %p223, %p224
      %s226 = ssub.s32 %s20, %s27
      %p227 = scmp.eq.s32.totalorder %s226, 0
      %s229 = sadd.s32 %s228, 1
      %s230 = scalar_select %p227, %s228, %s229
      %p233 = pneg %p227
      %p234 = scmp.eq.s32.totalorder %s20, 1
      %p235 = por %p233, %p234
      %p236 = scmp.ne.s32.totalorder %s228, %s231
      %p237 = scmp.eq.s32.totalorder %s20, 0
      %p238 = por %p236, %p237
      %p239 = scmp.ne.s32.totalorder %s228, %s231
      %p240 = scmp.eq.s32.totalorder %s25, 1
      %p241 = por %p239, %p240
      %p242 = scmp.ne.s32.totalorder %s231, %s232
      %p243 = scmp.eq.s32.totalorder %s25, 0
      %p244 = por %p242, %p243
      %p245 = scmp.ne.s32.totalorder %s231, %s232
      %p246 = scmp.eq.s32.totalorder %s26, 1
      %p247 = por %p245, %p246
      %p249 = scmp.ne.s32.totalorder %s232, %s248
      %p250 = scmp.eq.s32.totalorder %s26, 0
      %p251 = por %p249, %p250
      %s252 = ssub.s32 %s20, %s27
      %p253 = scmp.eq.s32.totalorder %s252, 0
      %s255 = sadd.s32 %s254, 1
      %s256 = scalar_select %p253, %s254, %s255
      %p259 = pneg %p253
      %p260 = scmp.eq.s32.totalorder %s20, 1
      %p261 = por %p259, %p260
      %p262 = scmp.ne.s32.totalorder %s254, %s257
      %p263 = scmp.eq.s32.totalorder %s20, 0
      %p264 = por %p262, %p263
      %p265 = scmp.ne.s32.totalorder %s254, %s257
      %p266 = scmp.eq.s32.totalorder %s25, 1
      %p267 = por %p265, %p266
      %p268 = scmp.ne.s32.totalorder %s257, %s258
      %p269 = scmp.eq.s32.totalorder %s25, 0
      %p270 = por %p268, %p269
      %p271 = scmp.ne.s32.totalorder %s257, %s258
      %p272 = scmp.eq.s32.totalorder %s26, 1
      %p273 = por %p271, %p272
      %p275 = scmp.ne.s32.totalorder %s258, %s274
      %p276 = scmp.eq.s32.totalorder %s26, 0
      %p277 = por %p275, %p276
      %s278 = ssub.s32 %s20, %s27
      %p279 = scmp.eq.s32.totalorder %s278, 0
      %s281 = sadd.s32 %s280, 1
      %s282 = scalar_select %p279, %s280, %s281
      %p285 = pneg %p279
      %p286 = scmp.eq.s32.totalorder %s20, 1
      %p287 = por %p285, %p286
      %p288 = scmp.ne.s32.totalorder %s280, %s283
      %p289 = scmp.eq.s32.totalorder %s20, 0
      %p290 = por %p288, %p289
      %p291 = scmp.ne.s32.totalorder %s280, %s283
      %p292 = scmp.eq.s32.totalorder %s25, 1
      %p293 = por %p291, %p292
      %p294 = scmp.ne.s32.totalorder %s283, %s284
      %p295 = scmp.eq.s32.totalorder %s25, 0
      %p296 = por %p294, %p295
      %p297 = scmp.ne.s32.totalorder %s283, %s284
      %p298 = scmp.eq.s32.totalorder %s26, 1
      %p299 = por %p297, %p298
      %p301 = scmp.ne.s32.totalorder %s284, %s300
      %p302 = scmp.eq.s32.totalorder %s26, 0
      %p303 = por %p301, %p302
      %s304 = ssub.s32 %s20, %s27
      %p305 = scmp.eq.s32.totalorder %s304, 0
      %s307 = sadd.s32 %s306, 1
      %s308 = scalar_select %p305, %s306, %s307
      %p311 = pneg %p305
      %p312 = scmp.eq.s32.totalorder %s20, 1
      %p313 = por %p311, %p312
      %p314 = scmp.ne.s32.totalorder %s306, %s309
      %p315 = scmp.eq.s32.totalorder %s20, 0
      %p316 = por %p314, %p315
      %p317 = scmp.ne.s32.totalorder %s306, %s309
      %p318 = scmp.eq.s32.totalorder %s25, 1
      %p319 = por %p317, %p318
      %p320 = scmp.ne.s32.totalorder %s309, %s310
      %p321 = scmp.eq.s32.totalorder %s25, 0
      %p322 = por %p320, %p321
      %p323 = scmp.ne.s32.totalorder %s309, %s310
      %p324 = scmp.eq.s32.totalorder %s26, 1
      %p325 = por %p323, %p324
      %p327 = scmp.ne.s32.totalorder %s310, %s326
      %p328 = scmp.eq.s32.totalorder %s26, 0
      %p329 = por %p327, %p328
      %s330 = ssub.s32 %s20, %s27
      %p331 = scmp.eq.s32.totalorder %s330, 0
      %s333 = sadd.s32 %s332, 1
      %s334 = scalar_select %p331, %s332, %s333
      %p337 = pneg %p331
      %p338 = scmp.eq.s32.totalorder %s20, 1
      %p339 = por %p337, %p338
      %p340 = scmp.ne.s32.totalorder %s332, %s335
      %p341 = scmp.eq.s32.totalorder %s20, 0
      %p342 = por %p340, %p341
      %p343 = scmp.ne.s32.totalorder %s332, %s335
      %p344 = scmp.eq.s32.totalorder %s25, 1
      %p345 = por %p343, %p344
      %p346 = scmp.ne.s32.totalorder %s335, %s336
      %p347 = scmp.eq.s32.totalorder %s25, 0
      %p348 = por %p346, %p347
      %p349 = scmp.ne.s32.totalorder %s335, %s336
      %p350 = scmp.eq.s32.totalorder %s26, 1
      %p351 = por %p349, %p350
      %p353 = scmp.ne.s32.totalorder %s336, %s352
      %p354 = scmp.eq.s32.totalorder %s26, 0
      %p355 = por %p353, %p354
      %s357 = sadd.s32 %s356, 1
      %p360 = scmp.eq.s32.totalorder %s20, 1
      %p361 = scmp.ne.s32.totalorder %s356, %s358
      %p362 = scmp.eq.s32.totalorder %s20, 0
      %p363 = por %p361, %p362
      %p364 = scmp.ne.s32.totalorder %s356, %s358
      %p365 = scmp.eq.s32.totalorder %s25, 1
      %p366 = por %p364, %p365
      %p367 = scmp.ne.s32.totalorder %s358, %s359
      %p368 = scmp.eq.s32.totalorder %s25, 0
      %p369 = por %p367, %p368
      %p370 = scmp.ne.s32.totalorder %s358, %s359
      %p371 = scmp.eq.s32.totalorder %s26, 1
      %p372 = por %p370, %p371
      %p374 = scmp.ne.s32.totalorder %s359, %s373
      %p375 = scmp.eq.s32.totalorder %s26, 0
      %p376 = por %p374, %p375
      %p377 = scmp.le.s32.totalorder 1, %s20
      %p378 = scmp.lt.s32.totalorder %s20, 3
      %p379 = pnand %p377, %p378
      %p380 = pneg %p379
      // Predicated region
      $region9: #{tpu_custom_call.1} parent=5 // pred_check
        _
      $region10: #{tpu_custom_call.1} parent=5 // pred_check_branch
        %382 = sbr.rel (%p379) target = $region12
      $region11: #{tpu_custom_call.1} parent=5 // pred_region
        %s383 = ssub.s32 %s20, 1
        // Predicated region
        $region13: #{tpu_custom_call.1} parent=11 // pred_check
          %p384 = pneg %p41
        $region14: #{tpu_custom_call.1} parent=11 // pred_check_branch
          %386 = sbr.rel (%p384) target = $region16
        $region15: #{tpu_custom_call.1} parent=11 // pred_region
          _
        $region16: #{tpu_custom_call.1} parent=11 // pred_fallthru
          _
        // Predicated region
        $region17: #{tpu_custom_call.1} parent=11 // pred_check
          %p387 = pneg %p62
        $region18: #{tpu_custom_call.1} parent=11 // pred_check_branch
          %389 = sbr.rel (%p387) target = $region20
        $region19: #{tpu_custom_call.1} parent=11 // pred_region
          _
        $region20: #{tpu_custom_call.1} parent=11 // pred_fallthru
          _
      $region12: #{tpu_custom_call.1} parent=5 // pred_fallthru
        _
      %p390 = scmp.lt.s32.totalorder %s20, 2
      // Predicated region
      $region21: #{tpu_custom_call.1} parent=5 // pred_check
        %p391 = pneg %p390
      $region22: #{tpu_custom_call.1} parent=5 // pred_check_branch
        %393 = sbr.rel (%p391) target = $region24
      $region23: #{tpu_custom_call.1} parent=5 // pred_region
        // Predicated region
        $region25: #{tpu_custom_call.1} parent=23 // pred_check
          %p394 = pneg %p82
        $region26: #{tpu_custom_call.1} parent=23 // pred_check_branch
          %396 = sbr.rel (%p394) target = $region28
        $region27: #{tpu_custom_call.1} parent=23 // pred_region
          %p397 = scmp.lt.s32.totalorder %s20, 1
          %s398 = scalar_select %p397, %s20, 1
          %s399 = scalar_lea.vmem %s2, %s398
        $region28: #{tpu_custom_call.1} parent=23 // pred_fallthru
          _
        // Predicated region
        $region29: #{tpu_custom_call.1} parent=23 // pred_check
          %p400 = pneg %p108
        $region30: #{tpu_custom_call.1} parent=23 // pred_check_branch
          %402 = sbr.rel (%p400) target = $region32
        $region31: #{tpu_custom_call.1} parent=23 // pred_region
          %p403 = scmp.lt.s32.totalorder %s20, 1
          %s404 = scalar_select %p403, %s20, 1
          %s405 = scalar_lea.vmem %s3, %s404
        $region32: #{tpu_custom_call.1} parent=23 // pred_fallthru
          _
        // Predicated region
        $region33: #{tpu_custom_call.1} parent=23 // pred_check
          %p406 = pneg %p134
        $region34: #{tpu_custom_call.1} parent=23 // pred_check_branch
          %408 = sbr.rel (%p406) target = $region36
        $region35: #{tpu_custom_call.1} parent=23 // pred_region
          %p409 = scmp.lt.s32.totalorder %s20, 1
          %s410 = scalar_select %p409, %s20, 1
          %s411 = smul.addr %s410, 16
          %s412 = smul.addr %s411, 4
          %s413 = scalar_lea.vmem %s4, %s412
        $region36: #{tpu_custom_call.1} parent=23 // pred_fallthru
          _
        // Predicated region
        $region37: #{tpu_custom_call.1} parent=23 // pred_check
          %p414 = pneg %p160
        $region38: #{tpu_custom_call.1} parent=23 // pred_check_branch
          %416 = sbr.rel (%p414) target = $region40
        $region39: #{tpu_custom_call.1} parent=23 // pred_region
          %p417 = scmp.lt.s32.totalorder %s20, 1
          %s418 = scalar_select %p417, %s20, 1
          %s419 = smul.addr %s418, 4
          %s420 = smul.addr %s419, 4
          %s421 = scalar_lea.vmem %s5, %s420
        $region40: #{tpu_custom_call.1} parent=23 // pred_fallthru
          _
        // Predicated region
        $region41: #{tpu_custom_call.1} parent=23 // pred_check
          %p422 = pneg %p186
        $region42: #{tpu_custom_call.1} parent=23 // pred_check_branch
          %424 = sbr.rel (%p422) target = $region44
        $region43: #{tpu_custom_call.1} parent=23 // pred_region
          %p425 = scmp.lt.s32.totalorder %s20, 1
          %s426 = scalar_select %p425, %s20, 1
          %s427 = scalar_lea.vmem %s6, %s426
        $region44: #{tpu_custom_call.1} parent=23 // pred_fallthru
          _
        // Predicated region
        $region45: #{tpu_custom_call.1} parent=23 // pred_check
          %p428 = pneg %p212
        $region46: #{tpu_custom_call.1} parent=23 // pred_check_branch
          %430 = sbr.rel (%p428) target = $region48
        $region47: #{tpu_custom_call.1} parent=23 // pred_region
          %p431 = scmp.lt.s32.totalorder %s20, 1
          %s432 = scalar_select %p431, %s20, 1
          %s433 = scalar_lea.vmem %s7, %s432
        $region48: #{tpu_custom_call.1} parent=23 // pred_fallthru
          _
        // Predicated region
        $region49: #{tpu_custom_call.1} parent=23 // pred_check
          %p434 = pneg %p238
        $region50: #{tpu_custom_call.1} parent=23 // pred_check_branch
          %436 = sbr.rel (%p434) target = $region52
        $region51: #{tpu_custom_call.1} parent=23 // pred_region
          %p437 = scmp.lt.s32.totalorder %s20, 1
          %s438 = scalar_select %p437, %s20, 1
          %s439 = scalar_lea.vmem %s8, %s438
        $region52: #{tpu_custom_call.1} parent=23 // pred_fallthru
          _
        // Predicated region
        $region53: #{tpu_custom_call.1} parent=23 // pred_check
          %p440 = pneg %p264
        $region54: #{tpu_custom_call.1} parent=23 // pred_check_branch
          %442 = sbr.rel (%p440) target = $region56
        $region55: #{tpu_custom_call.1} parent=23 // pred_region
          %p443 = scmp.lt.s32.totalorder %s20, 1
          %s444 = scalar_select %p443, %s20, 1
          %s445 = smul.addr %s444, 4
          %s446 = smul.addr %s445, 4
          %s447 = scalar_lea.vmem %s9, %s446
        $region56: #{tpu_custom_call.1} parent=23 // pred_fallthru
          _
        // Predicated region
        $region57: #{tpu_custom_call.1} parent=23 // pred_check
          %p448 = pneg %p290
        $region58: #{tpu_custom_call.1} parent=23 // pred_check_branch
          %450 = sbr.rel (%p448) target = $region60
        $region59: #{tpu_custom_call.1} parent=23 // pred_region
          %p451 = scmp.lt.s32.totalorder %s20, 1
          %s452 = scalar_select %p451, %s20, 1
          %s453 = scalar_lea.vmem %s10, %s452
        $region60: #{tpu_custom_call.1} parent=23 // pred_fallthru
          _
        // Predicated region
        $region61: #{tpu_custom_call.1} parent=23 // pred_check
          %p454 = pneg %p316
        $region62: #{tpu_custom_call.1} parent=23 // pred_check_branch
          %456 = sbr.rel (%p454) target = $region64
        $region63: #{tpu_custom_call.1} parent=23 // pred_region
          %p457 = scmp.lt.s32.totalorder %s20, 1
          %s458 = scalar_select %p457, %s20, 1
          %s459 = smul.addr %s458, 8
          %s460 = smul.addr %s459, 4
          %s461 = scalar_lea.vmem %s11, %s460
        $region64: #{tpu_custom_call.1} parent=23 // pred_fallthru
          _
        // Predicated region
        $region65: #{tpu_custom_call.1} parent=23 // pred_check
          %p462 = pneg %p342
        $region66: #{tpu_custom_call.1} parent=23 // pred_check_branch
          %464 = sbr.rel (%p462) target = $region68
        $region67: #{tpu_custom_call.1} parent=23 // pred_region
          %p465 = scmp.lt.s32.totalorder %s20, 1
          %s466 = scalar_select %p465, %s20, 1
          %s467 = scalar_lea.vmem %s12, %s466
        $region68: #{tpu_custom_call.1} parent=23 // pred_fallthru
          _
      $region24: #{tpu_custom_call.1} parent=5 // pred_fallthru
        _
      %p468 = scmp.le.s32.totalorder 1, %s20
      %p469 = scmp.lt.s32.totalorder %s20, 3
      %p470 = pnand %p468, %p469
      %p471 = pneg %p470
      // Predicated region
      $region69: #{tpu_custom_call.1} parent=5 // pred_check
        _
      $region70: #{tpu_custom_call.1} parent=5 // pred_check_branch
        %473 = sbr.rel (%p470) target = $region72
      $region71: #{tpu_custom_call.1} parent=5 // pred_region
        %s474 = ssub.s32 %s20, 1
        %p475 = pneg %p41
        %p476 = pneg %p38
        %p477 = pneg %p62
        %p478 = pneg %p59
        %p479 = scmp.lt.s32.totalorder %s25, 1
        %s480 = scalar_select %p479, %s25, 1
        %s481 = scalar_lea.vmem %s2, %s480
        %p482 = pneg %p88
        %p483 = pneg %p85
        %p484 = scmp.lt.s32.totalorder %s25, 1
        %s485 = scalar_select %p484, %s25, 1
        %s486 = scalar_lea.vmem %s3, %s485
        %p487 = pneg %p114
        %p488 = pneg %p111
        %p489 = scmp.lt.s32.totalorder %s25, 1
        %s490 = scalar_select %p489, %s25, 1
        %s491 = smul.addr %s490, 16
        %s492 = smul.addr %s491, 4
        %s493 = scalar_lea.vmem %s4, %s492
        %p494 = pneg %p140
        %p495 = pneg %p137
        %p496 = scmp.lt.s32.totalorder %s25, 1
        %s497 = scalar_select %p496, %s25, 1
        %s498 = smul.addr %s497, 4
        %s499 = smul.addr %s498, 4
        %s500 = scalar_lea.vmem %s5, %s499
        %p501 = pneg %p166
        %p502 = pneg %p163
        %p503 = scmp.lt.s32.totalorder %s25, 1
        %s504 = scalar_select %p503, %s25, 1
        %s505 = scalar_lea.vmem %s6, %s504
        %p506 = pneg %p192
        %p507 = pneg %p189
        %p508 = scmp.lt.s32.totalorder %s25, 1
        %s509 = scalar_select %p508, %s25, 1
        %s510 = scalar_lea.vmem %s7, %s509
        %p511 = pneg %p218
        %p512 = pneg %p215
        %p513 = scmp.lt.s32.totalorder %s25, 1
        %s514 = scalar_select %p513, %s25, 1
        %s515 = scalar_lea.vmem %s8, %s514
        %p516 = pneg %p244
        %p517 = pneg %p241
        %p518 = scmp.lt.s32.totalorder %s25, 1
        %s519 = scalar_select %p518, %s25, 1
        %s520 = smul.addr %s519, 4
        %s521 = smul.addr %s520, 4
        %s522 = scalar_lea.vmem %s9, %s521
        %p523 = pneg %p270
        %p524 = pneg %p267
        %p525 = scmp.lt.s32.totalorder %s25, 1
        %s526 = scalar_select %p525, %s25, 1
        %s527 = scalar_lea.vmem %s10, %s526
        %p528 = pneg %p296
        %p529 = pneg %p293
        %p530 = scmp.lt.s32.totalorder %s25, 1
        %s531 = scalar_select %p530, %s25, 1
        %s532 = smul.addr %s531, 8
        %s533 = smul.addr %s532, 4
        %s534 = scalar_lea.vmem %s11, %s533
        %p535 = pneg %p322
        %p536 = pneg %p319
        %p537 = scmp.lt.s32.totalorder %s25, 1
        %s538 = scalar_select %p537, %s25, 1
        %s539 = scalar_lea.vmem %s12, %s538
        %p540 = pneg %p348
        %p541 = pneg %p345
        %p542 = pneg %p369
        %p543 = pneg %p366
        %p544 = scmp.lt.s32.totalorder %s25, 1
        %s545 = scalar_select %p544, %s25, 1
        %s546 = scalar_lea.vmem %s2, %s545
        %p547 = scmp.lt.s32.totalorder %s25, 1
        %s548 = scalar_select %p547, %s25, 1
        %s549 = scalar_lea.vmem %s3, %s548
        %p550 = scmp.lt.s32.totalorder %s25, 1
        %s551 = scalar_select %p550, %s25, 1
        %s552 = smul.addr %s551, 16
        %s553 = smul.addr %s552, 4
        %s554 = scalar_lea.vmem %s4, %s553
        %p555 = scmp.lt.s32.totalorder %s25, 1
        %s556 = scalar_select %p555, %s25, 1
        %s557 = smul.addr %s556, 4
        %s558 = smul.addr %s557, 4
        %s559 = scalar_lea.vmem %s5, %s558
        %p560 = scmp.lt.s32.totalorder %s25, 1
        %s561 = scalar_select %p560, %s25, 1
        %s562 = scalar_lea.vmem %s6, %s561
        %p563 = scmp.lt.s32.totalorder %s25, 1
        %s564 = scalar_select %p563, %s25, 1
        %s565 = scalar_lea.vmem %s7, %s564
        %p566 = scmp.lt.s32.totalorder %s25, 1
        %s567 = scalar_select %p566, %s25, 1
        %s568 = scalar_lea.vmem %s8, %s567
        %p569 = scmp.lt.s32.totalorder %s25, 1
        %s570 = scalar_select %p569, %s25, 1
        %s571 = smul.addr %s570, 4
        %s572 = smul.addr %s571, 4
        %s573 = scalar_lea.vmem %s9, %s572
        %p574 = scmp.lt.s32.totalorder %s25, 1
        %s575 = scalar_select %p574, %s25, 1
        %s576 = scalar_lea.vmem %s10, %s575
        %p577 = scmp.lt.s32.totalorder %s25, 1
        %s578 = scalar_select %p577, %s25, 1
        %s579 = smul.addr %s578, 8
        %s580 = smul.addr %s579, 4
        %s581 = scalar_lea.vmem %s11, %s580
        %p582 = scmp.lt.s32.totalorder %s25, 1
        %s583 = scalar_select %p582, %s25, 1
        %s584 = scalar_lea.vmem %s12, %s583
        %p586 = scmp.eq.s32.totalorder %s25, 0
        // Predicated region
        $region73: #{tpu_custom_call.1} parent=71 // pred_check
          %p587 = pneg %p586
        $region74: #{tpu_custom_call.1} parent=71 // pred_check_branch
          %589 = sbr.rel (%p587) target = $region76
        $region75: #{tpu_custom_call.1} parent=71 // pred_region
          %v590 = vld [vmem:[%s0] sm:$0xff]
          %v591 = vld [vmem:[%s0 + $0x8] sm:$0xff]
          %vm592 = vcmask 261120
          %593 = vst.msk [vmem:[#allocation2] sm:$0xff] %vm592, %v590
          %594 = vst.msk [vmem:[#allocation2 + $0x8] sm:$0xff] %vm592, %v591
        $region76: #{tpu_custom_call.1} parent=71 // pred_fallthru
          _
        %v595 = vld [vmem:[#allocation2] sm:$0xff]
        %v596 = vld [vmem:[#allocation2 + $0x8] sm:$0xff]
        %v597 = vld [vmem:[%s546] sm:$0x1]
        %v598 = vld [vmem:[%s549] sm:$0x1]
        %vm599 = vcmask 261120
        %v600 = vsel %vm599, %v595, 0.0
        %601 = vadd.xlane.f32.xlu0 %v600
        %v602 = vpop.xlane.xlu0 %601
        %v603 = vsel %vm599, %v596, 0.0
        %604 = vadd.xlane.f32.xlu0 %v603
        %v605 = vpop.xlane.xlu0 %604
        %v606 = vrcp.pop 32.0
        %v607 = vmul.f32 32.0, %v606
        %v608 = vsub.f32 1.0, %v607
        %v609 = vmul.f32 %v606, %v608
        %v610 = vadd.f32 %v606, %v609
        %vm611 = vweird.f32 %v606
        %v612 = vsel %vm611, %v606, %v610
        %v613 = vmul.f32 %v602, %v612
        %v614 = vmul.f32 %v605, %v612
        %v615 = vsub.f32 %v595, %v613
        %v616 = vsub.f32 %v596, %v614
        %v617 = vmul.f32 %v615, %v615
        %v618 = vmul.f32 %v616, %v616
        %v619 = vsel %vm599, %v617, 0.0
        %620 = vadd.xlane.f32.xlu0 %v619
        %v621 = vpop.xlane.xlu0 %620
        %v622 = vsel %vm599, %v618, 0.0
        %623 = vadd.xlane.f32.xlu0 %v622
        %v624 = vpop.xlane.xlu0 %623
        %v625 = vmul.f32 %v621, %v612
        %v626 = vmul.f32 %v624, %v612
        %v627 = vadd.f32 %v625, 1e-05
        %v628 = vadd.f32 %v626, 1e-05
        %v629 = vrsqrt.pop %v627
        %v630 = vmul.f32 %v629, %v627
        %v631 = vmul.f32 %v630, %v629
        %v632 = vmul.f32 0.5, %v631
        %v633 = vsub.f32 1.5, %v632
        %v634 = vmul.f32 %v629, %v633
        %vm635 = vweird.f32 %v627
        %vm636 = vweird.f32 %v629
        %vm637 = vmor %vm635, %vm636
        %v638 = vsel %vm637, %v629, %v634
        %v639 = vrsqrt.pop %v628
        %v640 = vmul.f32 %v639, %v628
        %v641 = vmul.f32 %v640, %v639
        %v642 = vmul.f32 0.5, %v641
        %v643 = vsub.f32 1.5, %v642
        %v644 = vmul.f32 %v639, %v643
        %vm645 = vweird.f32 %v628
        %vm646 = vweird.f32 %v639
        %vm647 = vmor %vm645, %vm646
        %v648 = vsel %vm647, %v639, %v644
        %v649 = vmul.f32 %v615, %v638
        %v650 = vmul.f32 %v616, %v648
        %v652 = vperm.slane %v597, 0
        %v654 = vmul.f32 %v649, %v652
        %v655 = vmul.f32 %v650, %v652
        %v657 = vperm.slane %v598, 0
        %v659 = vadd.f32 %v654, %v657
        %v660 = vadd.f32 %v655, %v657
        %v661 = vpack.c.bf16 %v659, %v659
        %v662 = vpack.c.bf16 %v660, %v660
        %v663 = vld [vmem:[%s554] sm:$0xf]
        %v664 = vld [vmem:[%s554 + $0x4] sm:$0xf]
        %v665 = vld [vmem:[%s554 + $0x8] sm:$0xf]
        %v666 = vld [vmem:[%s554 + $0xc] sm:$0xf]
        %v667 = vld [vmem:[%s554 + $0x10] sm:$0xf]
        %v668 = vld [vmem:[%s554 + $0x14] sm:$0xf]
        %v669 = vld [vmem:[%s554 + $0x18] sm:$0xf]
        %v670 = vld [vmem:[%s554 + $0x1c] sm:$0xf]
        %v671 = vld [vmem:[%s554 + $0x20] sm:$0xf]
        %v672 = vld [vmem:[%s554 + $0x24] sm:$0xf]
        %v673 = vld [vmem:[%s554 + $0x28] sm:$0xf]
        %v674 = vld [vmem:[%s554 + $0x2c] sm:$0xf]
        %v675 = vld [vmem:[%s554 + $0x30] sm:$0xf]
        %v676 = vld [vmem:[%s554 + $0x34] sm:$0xf]
        %v677 = vld [vmem:[%s554 + $0x38] sm:$0xf]
        %v678 = vld [vmem:[%s554 + $0x3c] sm:$0xf]
        %v683 = vunpack.c.l.b16 %v663
        %v684 = vunpack.c.l.b16 %v664
        %v685 = vunpack.c.l.b16 %v665
        %v686 = vunpack.c.l.b16 %v666
        %v687 = vpack.c.b16 %v684, %v683
        %v688 = vpack.c.b16 %v686, %v685
        %v692 = vsel %vm599, %v661, 0
        %694 = vmatpush.bf16.msra.mxu0 0
        %695 = vmatpush.bf16.msra.mxu0 0
        %696 = vmatpush.bf16.msra.mxu0 0
        %697 = vmatpush.bf16.msra.mxu0 0
        %698 = vmatpush.bf16.msra.mxu0 0
        %699 = vmatpush.bf16.msra.mxu0 0
        %700 = vmatpush.bf16.msra.mxu0 %v688
        %701 = vmatpush.bf16.msra.mxu0 %v687
        %702 = vmatmul.bf16.gmra.mxu0 %v692
        %v703 = vpop.f32.mrf.mxu0
        %v704 = vadd.f32 0.0, %v703
        %v705 = vpop.f32.mrf.mxu0
        %706 = vdwg.mxu0
        %v711 = vunpack.c.l.b16 %v667
        %v712 = vunpack.c.l.b16 %v668
        %v713 = vunpack.c.l.b16 %v669
        %v714 = vunpack.c.l.b16 %v670
        %v715 = vpack.c.b16 %v712, %v711
        %v716 = vpack.c.b16 %v714, %v713
        %719 = vmatpush.bf16.msra.mxu0 0
        %720 = vmatpush.bf16.msra.mxu0 0
        %721 = vmatpush.bf16.msra.mxu0 0
        %722 = vmatpush.bf16.msra.mxu0 0
        %723 = vmatpush.bf16.msra.mxu0 0
        %724 = vmatpush.bf16.msra.mxu0 0
        %725 = vmatpush.bf16.msra.mxu0 %v716
        %726 = vmatpush.bf16.msra.mxu0 %v715
        %727 = vmatmul.bf16.gmra.mxu0 %v692
        %v728 = vpop.f32.mrf.mxu0
        %v729 = vadd.f32 0.0, %v728
        %v730 = vpop.f32.mrf.mxu0
        %731 = vdwg.mxu0
        %v736 = vunpack.c.l.b16 %v671
        %v737 = vunpack.c.l.b16 %v672
        %v738 = vunpack.c.l.b16 %v673
        %v739 = vunpack.c.l.b16 %v674
        %v740 = vpack.c.b16 %v737, %v736
        %v741 = vpack.c.b16 %v739, %v738
        %744 = vmatpush.bf16.msra.mxu0 0
        %745 = vmatpush.bf16.msra.mxu0 0
        %746 = vmatpush.bf16.msra.mxu0 0
        %747 = vmatpush.bf16.msra.mxu0 0
        %748 = vmatpush.bf16.msra.mxu0 0
        %749 = vmatpush.bf16.msra.mxu0 0
        %750 = vmatpush.bf16.msra.mxu0 %v741
        %751 = vmatpush.bf16.msra.mxu0 %v740
        %752 = vmatmul.bf16.gmra.mxu0 %v692
        %v753 = vpop.f32.mrf.mxu0
        %v754 = vadd.f32 0.0, %v753
        %v755 = vpop.f32.mrf.mxu0
        %756 = vdwg.mxu0
        %v761 = vunpack.c.l.b16 %v675
        %v762 = vunpack.c.l.b16 %v676
        %v763 = vunpack.c.l.b16 %v677
        %v764 = vunpack.c.l.b16 %v678
        %v765 = vpack.c.b16 %v762, %v761
        %v766 = vpack.c.b16 %v764, %v763
        %769 = vmatpush.bf16.msra.mxu0 0
        %770 = vmatpush.bf16.msra.mxu0 0
        %771 = vmatpush.bf16.msra.mxu0 0
        %772 = vmatpush.bf16.msra.mxu0 0
        %773 = vmatpush.bf16.msra.mxu0 0
        %774 = vmatpush.bf16.msra.mxu0 0
        %775 = vmatpush.bf16.msra.mxu0 %v766
        %776 = vmatpush.bf16.msra.mxu0 %v765
        %777 = vmatmul.bf16.gmra.mxu0 %v692
        %v778 = vpop.f32.mrf.mxu0
        %v779 = vadd.f32 0.0, %v778
        %v780 = vpop.f32.mrf.mxu0
        %781 = vdwg.mxu0
        %v783 = vsel %vm599, %v662, 0
        %785 = vmatpush.bf16.msra.mxu0 0
        %786 = vmatpush.bf16.msra.mxu0 0
        %787 = vmatpush.bf16.msra.mxu0 0
        %788 = vmatpush.bf16.msra.mxu0 0
        %789 = vmatpush.bf16.msra.mxu0 0
        %790 = vmatpush.bf16.msra.mxu0 0
        %791 = vmatpush.bf16.msra.mxu0 %v688
        %792 = vmatpush.bf16.msra.mxu0 %v687
        %793 = vmatmul.bf16.gmra.mxu0 %v783
        %v794 = vpop.f32.mrf.mxu0
        %v795 = vadd.f32 0.0, %v794
        %v796 = vpop.f32.mrf.mxu0
        %797 = vdwg.mxu0
        %798 = vmatpush.bf16.msra.mxu0 0
        %799 = vmatpush.bf16.msra.mxu0 0
        %800 = vmatpush.bf16.msra.mxu0 0
        %801 = vmatpush.bf16.msra.mxu0 0
        %802 = vmatpush.bf16.msra.mxu0 0
        %803 = vmatpush.bf16.msra.mxu0 0
        %804 = vmatpush.bf16.msra.mxu0 %v716
        %805 = vmatpush.bf16.msra.mxu0 %v715
        %806 = vmatmul.bf16.gmra.mxu0 %v783
        %v807 = vpop.f32.mrf.mxu0
        %v808 = vadd.f32 0.0, %v807
        %v809 = vpop.f32.mrf.mxu0
        %810 = vdwg.mxu0
        %811 = vmatpush.bf16.msra.mxu0 0
        %812 = vmatpush.bf16.msra.mxu0 0
        %813 = vmatpush.bf16.msra.mxu0 0
        %814 = vmatpush.bf16.msra.mxu0 0
        %815 = vmatpush.bf16.msra.mxu0 0
        %816 = vmatpush.bf16.msra.mxu0 0
        %817 = vmatpush.bf16.msra.mxu0 %v741
        %818 = vmatpush.bf16.msra.mxu0 %v740
        %819 = vmatmul.bf16.gmra.mxu0 %v783
        %v820 = vpop.f32.mrf.mxu0
        %v821 = vadd.f32 0.0, %v820
        %v822 = vpop.f32.mrf.mxu0
        %823 = vdwg.mxu0
        %824 = vmatpush.bf16.msra.mxu0 0
        %825 = vmatpush.bf16.msra.mxu0 0
        %826 = vmatpush.bf16.msra.mxu0 0
        %827 = vmatpush.bf16.msra.mxu0 0
        %828 = vmatpush.bf16.msra.mxu0 0
        %829 = vmatpush.bf16.msra.mxu0 0
        %830 = vmatpush.bf16.msra.mxu0 %v766
        %831 = vmatpush.bf16.msra.mxu0 %v765
        %832 = vmatmul.bf16.gmra.mxu0 %v783
        %v833 = vpop.f32.mrf.mxu0
        %v834 = vadd.f32 0.0, %v833
        %v835 = vpop.f32.mrf.mxu0
        %836 = vdwg.mxu0
        %v837 = vpack.c.bf16 %v704, %v704
        %v838 = vpack.c.bf16 %v729, %v729
        %v839 = vpack.c.bf16 %v754, %v754
        %v840 = vpack.c.bf16 %v779, %v779
        %v841 = vpack.c.bf16 %v795, %v795
        %v842 = vpack.c.bf16 %v808, %v808
        %v843 = vpack.c.bf16 %v821, %v821
        %v844 = vpack.c.bf16 %v834, %v834
        %v845 = vld [vmem:[%s1] sm:$0xff]
        %v846 = vld [vmem:[%s1 + $0x8] sm:$0xff]
        %v847 = vld [vmem:[%s1 + $0x10] sm:$0xff]
        %v848 = vld [vmem:[%s1 + $0x18] sm:$0xff]
        %v849 = vld [vmem:[%s1 + $0x20] sm:$0xff]
        %v850 = vld [vmem:[%s1 + $0x28] sm:$0xff]
        %v851 = vld [vmem:[%s1 + $0x30] sm:$0xff]
        %v852 = vld [vmem:[%s1 + $0x38] sm:$0xff]
        %v854 = vunpack.c.l.b16 %v837
        %v855 = vpack.c.b16 %v854, %v854
        %856 = vrot.lane.b32.xlu0 %v855, 120
        %v857 = vpop.permute.xlu0 %856
        %vm858 = vcmask 64512
        %v860 = vsel %vm858, %v837, 0
        %v863 = vsel %vm858, %v857, 0
        %865 = vmatpush.bf16.xpose.msra.mxu0 0
        %866 = vmatpush.bf16.xpose.msra.mxu0 0
        %867 = vmatpush.bf16.xpose.msra.mxu0 0
        %868 = vmatpush.bf16.xpose.msra.mxu0 0
        %869 = vmatpush.bf16.xpose.msra.mxu0 0
        %870 = vmatpush.bf16.xpose.msra.mxu0 0
        %871 = vmatpush.bf16.xpose.msra.mxu0 0
        %872 = vmatpush.bf16.xpose.msra.mxu0 %v863
        %873 = vmatmul.bf16.gmra.mxu0 %v860
        %v874 = vpop.f32.mrf.mxu0
        %v875 = vadd.f32 %v845, %v874
        %v876 = vpop.f32.mrf.mxu0
        %877 = vdwg.mxu0
        %v879 = vunpack.c.l.b16 %v838
        %v880 = vpack.c.b16 %v879, %v879
        %881 = vrot.lane.b32.xlu0 %v880, 120
        %v882 = vpop.permute.xlu0 %881
        %v884 = vsel %vm858, %v838, 0
        %v887 = vsel %vm858, %v882, 0
        %889 = vmatpush.bf16.xpose.msra.mxu0 0
        %890 = vmatpush.bf16.xpose.msra.mxu0 0
        %891 = vmatpush.bf16.xpose.msra.mxu0 0
        %892 = vmatpush.bf16.xpose.msra.mxu0 0
        %893 = vmatpush.bf16.xpose.msra.mxu0 0
        %894 = vmatpush.bf16.xpose.msra.mxu0 0
        %895 = vmatpush.bf16.xpose.msra.mxu0 0
        %896 = vmatpush.bf16.xpose.msra.mxu0 %v887
        %897 = vmatmul.bf16.gmra.mxu0 %v884
        %v898 = vpop.f32.mrf.mxu0
        %v899 = vadd.f32 %v846, %v898
        %v900 = vpop.f32.mrf.mxu0
        %901 = vdwg.mxu0
        %v903 = vunpack.c.l.b16 %v839
        %v904 = vpack.c.b16 %v903, %v903
        %905 = vrot.lane.b32.xlu0 %v904, 120
        %v906 = vpop.permute.xlu0 %905
        %v908 = vsel %vm858, %v839, 0
        %v911 = vsel %vm858, %v906, 0
        %913 = vmatpush.bf16.xpose.msra.mxu0 0
        %914 = vmatpush.bf16.xpose.msra.mxu0 0
        %915 = vmatpush.bf16.xpose.msra.mxu0 0
        %916 = vmatpush.bf16.xpose.msra.mxu0 0
        %917 = vmatpush.bf16.xpose.msra.mxu0 0
        %918 = vmatpush.bf16.xpose.msra.mxu0 0
        %919 = vmatpush.bf16.xpose.msra.mxu0 0
        %920 = vmatpush.bf16.xpose.msra.mxu0 %v911
        %921 = vmatmul.bf16.gmra.mxu0 %v908
        %v922 = vpop.f32.mrf.mxu0
        %v923 = vadd.f32 %v847, %v922
        %v924 = vpop.f32.mrf.mxu0
        %925 = vdwg.mxu0
        %v927 = vunpack.c.l.b16 %v840
        %v928 = vpack.c.b16 %v927, %v927
        %929 = vrot.lane.b32.xlu0 %v928, 120
        %v930 = vpop.permute.xlu0 %929
        %v932 = vsel %vm858, %v840, 0
        %v935 = vsel %vm858, %v930, 0
        %937 = vmatpush.bf16.xpose.msra.mxu0 0
        %938 = vmatpush.bf16.xpose.msra.mxu0 0
        %939 = vmatpush.bf16.xpose.msra.mxu0 0
        %940 = vmatpush.bf16.xpose.msra.mxu0 0
        %941 = vmatpush.bf16.xpose.msra.mxu0 0
        %942 = vmatpush.bf16.xpose.msra.mxu0 0
        %943 = vmatpush.bf16.xpose.msra.mxu0 0
        %944 = vmatpush.bf16.xpose.msra.mxu0 %v935
        %945 = vmatmul.bf16.gmra.mxu0 %v932
        %v946 = vpop.f32.mrf.mxu0
        %v947 = vadd.f32 %v848, %v946
        %v948 = vpop.f32.mrf.mxu0
        %949 = vdwg.mxu0
        %v951 = vunpack.c.l.b16 %v841
        %v952 = vpack.c.b16 %v951, %v951
        %953 = vrot.lane.b32.xlu0 %v952, 120
        %v954 = vpop.permute.xlu0 %953
        %v956 = vsel %vm858, %v841, 0
        %v959 = vsel %vm858, %v954, 0
        %961 = vmatpush.bf16.xpose.msra.mxu0 0
        %962 = vmatpush.bf16.xpose.msra.mxu0 0
        %963 = vmatpush.bf16.xpose.msra.mxu0 0
        %964 = vmatpush.bf16.xpose.msra.mxu0 0
        %965 = vmatpush.bf16.xpose.msra.mxu0 0
        %966 = vmatpush.bf16.xpose.msra.mxu0 0
        %967 = vmatpush.bf16.xpose.msra.mxu0 0
        %968 = vmatpush.bf16.xpose.msra.mxu0 %v959
        %969 = vmatmul.bf16.gmra.mxu0 %v956
        %v970 = vpop.f32.mrf.mxu0
        %v971 = vadd.f32 %v849, %v970
        %v972 = vpop.f32.mrf.mxu0
        %973 = vdwg.mxu0
        %v975 = vunpack.c.l.b16 %v842
        %v976 = vpack.c.b16 %v975, %v975
        %977 = vrot.lane.b32.xlu0 %v976, 120
        %v978 = vpop.permute.xlu0 %977
        %v980 = vsel %vm858, %v842, 0
        %v983 = vsel %vm858, %v978, 0
        %985 = vmatpush.bf16.xpose.msra.mxu0 0
        %986 = vmatpush.bf16.xpose.msra.mxu0 0
        %987 = vmatpush.bf16.xpose.msra.mxu0 0
        %988 = vmatpush.bf16.xpose.msra.mxu0 0
        %989 = vmatpush.bf16.xpose.msra.mxu0 0
        %990 = vmatpush.bf16.xpose.msra.mxu0 0
        %991 = vmatpush.bf16.xpose.msra.mxu0 0
        %992 = vmatpush.bf16.xpose.msra.mxu0 %v983
        %993 = vmatmul.bf16.gmra.mxu0 %v980
        %v994 = vpop.f32.mrf.mxu0
        %v995 = vadd.f32 %v850, %v994
        %v996 = vpop.f32.mrf.mxu0
        %997 = vdwg.mxu0
        %v999 = vunpack.c.l.b16 %v843
        %v1000 = vpack.c.b16 %v999, %v999
        %1001 = vrot.lane.b32.xlu0 %v1000, 120
        %v1002 = vpop.permute.xlu0 %1001
        %v1004 = vsel %vm858, %v843, 0
        %v1007 = vsel %vm858, %v1002, 0
        %1009 = vmatpush.bf16.xpose.msra.mxu0 0
        %1010 = vmatpush.bf16.xpose.msra.mxu0 0
        %1011 = vmatpush.bf16.xpose.msra.mxu0 0
        %1012 = vmatpush.bf16.xpose.msra.mxu0 0
        %1013 = vmatpush.bf16.xpose.msra.mxu0 0
        %1014 = vmatpush.bf16.xpose.msra.mxu0 0
        %1015 = vmatpush.bf16.xpose.msra.mxu0 0
        %1016 = vmatpush.bf16.xpose.msra.mxu0 %v1007
        %1017 = vmatmul.bf16.gmra.mxu0 %v1004
        %v1018 = vpop.f32.mrf.mxu0
        %v1019 = vadd.f32 %v851, %v1018
        %v1020 = vpop.f32.mrf.mxu0
        %1021 = vdwg.mxu0
        %v1023 = vunpack.c.l.b16 %v844
        %v1024 = vpack.c.b16 %v1023, %v1023
        %1025 = vrot.lane.b32.xlu0 %v1024, 120
        %v1026 = vpop.permute.xlu0 %1025
        %v1028 = vsel %vm858, %v844, 0
        %v1031 = vsel %vm858, %v1026, 0
        %1033 = vmatpush.bf16.xpose.msra.mxu0 0
        %1034 = vmatpush.bf16.xpose.msra.mxu0 0
        %1035 = vmatpush.bf16.xpose.msra.mxu0 0
        %1036 = vmatpush.bf16.xpose.msra.mxu0 0
        %1037 = vmatpush.bf16.xpose.msra.mxu0 0
        %1038 = vmatpush.bf16.xpose.msra.mxu0 0
        %1039 = vmatpush.bf16.xpose.msra.mxu0 0
        %1040 = vmatpush.bf16.xpose.msra.mxu0 %v1031
        %1041 = vmatmul.bf16.gmra.mxu0 %v1028
        %v1042 = vpop.f32.mrf.mxu0
        %v1043 = vadd.f32 %v852, %v1042
        %v1044 = vpop.f32.mrf.mxu0
        %1045 = vdwg.mxu0
        %v1046 = vsel %vm858, %v875, -inf
        %1047 = vmax.xlane.f32.xlu0 %v1046
        %v1048 = vpop.xlane.xlu0 %1047
        %v1049 = vsel %vm858, %v899, -inf
        %1050 = vmax.xlane.f32.xlu0 %v1049
        %v1051 = vpop.xlane.xlu0 %1050
        %v1052 = vsel %vm858, %v923, -inf
        %1053 = vmax.xlane.f32.xlu0 %v1052
        %v1054 = vpop.xlane.xlu0 %1053
        %v1055 = vsel %vm858, %v947, -inf
        %1056 = vmax.xlane.f32.xlu0 %v1055
        %v1057 = vpop.xlane.xlu0 %1056
        %v1058 = vsel %vm858, %v971, -inf
        %1059 = vmax.xlane.f32.xlu0 %v1058
        %v1060 = vpop.xlane.xlu0 %1059
        %v1061 = vsel %vm858, %v995, -inf
        %1062 = vmax.xlane.f32.xlu0 %v1061
        %v1063 = vpop.xlane.xlu0 %1062
        %v1064 = vsel %vm858, %v1019, -inf
        %1065 = vmax.xlane.f32.xlu0 %v1064
        %v1066 = vpop.xlane.xlu0 %1065
        %v1067 = vsel %vm858, %v1043, -inf
        %1068 = vmax.xlane.f32.xlu0 %v1067
        %v1069 = vpop.xlane.xlu0 %1068
        %v1070 = vsub.f32 %v875, %v1048
        %v1071 = vsub.f32 %v899, %v1051
        %v1072 = vsub.f32 %v923, %v1054
        %v1073 = vsub.f32 %v947, %v1057
        %v1074 = vsub.f32 %v971, %v1060
        %v1075 = vsub.f32 %v995, %v1063
        %v1076 = vsub.f32 %v1019, %v1066
        %v1077 = vsub.f32 %v1043, %v1069
        %v1078 = vmul.f32 %v1070, 1.442695
        %v1079 = vpow.pop %v1078
        %v1080 = vmul.f32 %v1071, 1.442695
        %v1081 = vpow.pop %v1080
        %v1082 = vmul.f32 %v1072, 1.442695
        %v1083 = vpow.pop %v1082
        %v1084 = vmul.f32 %v1073, 1.442695
        %v1085 = vpow.pop %v1084
        %v1086 = vmul.f32 %v1074, 1.442695
        %v1087 = vpow.pop %v1086
        %v1088 = vmul.f32 %v1075, 1.442695
        %v1089 = vpow.pop %v1088
        %v1090 = vmul.f32 %v1076, 1.442695
        %v1091 = vpow.pop %v1090
        %v1092 = vmul.f32 %v1077, 1.442695
        %v1093 = vpow.pop %v1092
        %v1094 = vsel %vm858, %v1079, 0.0
        %1095 = vadd.xlane.f32.xlu0 %v1094
        %v1096 = vpop.xlane.xlu0 %1095
        %v1097 = vsel %vm858, %v1081, 0.0
        %1098 = vadd.xlane.f32.xlu0 %v1097
        %v1099 = vpop.xlane.xlu0 %1098
        %v1100 = vsel %vm858, %v1083, 0.0
        %1101 = vadd.xlane.f32.xlu0 %v1100
        %v1102 = vpop.xlane.xlu0 %1101
        %v1103 = vsel %vm858, %v1085, 0.0
        %1104 = vadd.xlane.f32.xlu0 %v1103
        %v1105 = vpop.xlane.xlu0 %1104
        %v1106 = vsel %vm858, %v1087, 0.0
        %1107 = vadd.xlane.f32.xlu0 %v1106
        %v1108 = vpop.xlane.xlu0 %1107
        %v1109 = vsel %vm858, %v1089, 0.0
        %1110 = vadd.xlane.f32.xlu0 %v1109
        %v1111 = vpop.xlane.xlu0 %1110
        %v1112 = vsel %vm858, %v1091, 0.0
        %1113 = vadd.xlane.f32.xlu0 %v1112
        %v1114 = vpop.xlane.xlu0 %1113
        %v1115 = vsel %vm858, %v1093, 0.0
        %1116 = vadd.xlane.f32.xlu0 %v1115
        %v1117 = vpop.xlane.xlu0 %1116
        %v1118 = vrcp.pop %v1096
        %v1119 = vrcp.pop %v1099
        %v1120 = vrcp.pop %v1102
        %v1121 = vrcp.pop %v1105
        %v1122 = vrcp.pop %v1108
        %v1123 = vrcp.pop %v1111
        %v1124 = vrcp.pop %v1114
        %v1125 = vrcp.pop %v1117
        %v1126 = vmul.f32 %v1079, %v1118
        %v1127 = vmul.f32 %v1081, %v1119
        %v1128 = vmul.f32 %v1083, %v1120
        %v1129 = vmul.f32 %v1085, %v1121
        %v1130 = vmul.f32 %v1087, %v1122
        %v1131 = vmul.f32 %v1089, %v1123
        %v1132 = vmul.f32 %v1091, %v1124
        %v1133 = vmul.f32 %v1093, %v1125
        %v1134 = vpack.c.bf16 %v1126, %v1126
        %v1135 = vpack.c.bf16 %v1127, %v1127
        %v1136 = vpack.c.bf16 %v1128, %v1128
        %v1137 = vpack.c.bf16 %v1129, %v1129
        %v1138 = vpack.c.bf16 %v1130, %v1130
        %v1139 = vpack.c.bf16 %v1131, %v1131
        %v1140 = vpack.c.bf16 %v1132, %v1132
        %v1141 = vpack.c.bf16 %v1133, %v1133
        %1142 = vrot.lane.b32.xlu0 %v855, 112
        %v1143 = vpop.permute.xlu0 %1142
        %v1145 = vsel %vm858, %v1134, 0
        %vm1147 = vcmask 1043456
        %v1149 = vsel %vm1147, %v1143, 0
        %1151 = vmatpush.bf16.msra.mxu0 0
        %1152 = vmatpush.bf16.msra.mxu0 0
        %1153 = vmatpush.bf16.msra.mxu0 0
        %1154 = vmatpush.bf16.msra.mxu0 0
        %1155 = vmatpush.bf16.msra.mxu0 0
        %1156 = vmatpush.bf16.msra.mxu0 0
        %1157 = vmatpush.bf16.msra.mxu0 0
        %1158 = vmatpush.bf16.msra.mxu0 %v1149
        %1159 = vmatmul.bf16.gmra.mxu0 %v1145
        %v1160 = vpop.f32.mrf.mxu0
        %v1161 = vadd.f32 0.0, %v1160
        %v1162 = vpop.f32.mrf.mxu0
        %1163 = vdwg.mxu0
        %1164 = vrot.lane.b32.xlu0 %v880, 112
        %v1165 = vpop.permute.xlu0 %1164
        %v1167 = vsel %vm858, %v1135, 0
        %v1170 = vsel %vm1147, %v1165, 0
        %1172 = vmatpush.bf16.msra.mxu0 0
        %1173 = vmatpush.bf16.msra.mxu0 0
        %1174 = vmatpush.bf16.msra.mxu0 0
        %1175 = vmatpush.bf16.msra.mxu0 0
        %1176 = vmatpush.bf16.msra.mxu0 0
        %1177 = vmatpush.bf16.msra.mxu0 0
        %1178 = vmatpush.bf16.msra.mxu0 0
        %1179 = vmatpush.bf16.msra.mxu0 %v1170
        %1180 = vmatmul.bf16.gmra.mxu0 %v1167
        %v1181 = vpop.f32.mrf.mxu0
        %v1182 = vadd.f32 0.0, %v1181
        %v1183 = vpop.f32.mrf.mxu0
        %1184 = vdwg.mxu0
        %1185 = vrot.lane.b32.xlu0 %v904, 112
        %v1186 = vpop.permute.xlu0 %1185
        %v1188 = vsel %vm858, %v1136, 0
        %v1191 = vsel %vm1147, %v1186, 0
        %1193 = vmatpush.bf16.msra.mxu0 0
        %1194 = vmatpush.bf16.msra.mxu0 0
        %1195 = vmatpush.bf16.msra.mxu0 0
        %1196 = vmatpush.bf16.msra.mxu0 0
        %1197 = vmatpush.bf16.msra.mxu0 0
        %1198 = vmatpush.bf16.msra.mxu0 0
        %1199 = vmatpush.bf16.msra.mxu0 0
        %1200 = vmatpush.bf16.msra.mxu0 %v1191
        %1201 = vmatmul.bf16.gmra.mxu0 %v1188
        %v1202 = vpop.f32.mrf.mxu0
        %v1203 = vadd.f32 0.0, %v1202
        %v1204 = vpop.f32.mrf.mxu0
        %1205 = vdwg.mxu0
        %1206 = vrot.lane.b32.xlu0 %v928, 112
        %v1207 = vpop.permute.xlu0 %1206
        %v1209 = vsel %vm858, %v1137, 0
        %v1212 = vsel %vm1147, %v1207, 0
        %1214 = vmatpush.bf16.msra.mxu0 0
        %1215 = vmatpush.bf16.msra.mxu0 0
        %1216 = vmatpush.bf16.msra.mxu0 0
        %1217 = vmatpush.bf16.msra.mxu0 0
        %1218 = vmatpush.bf16.msra.mxu0 0
        %1219 = vmatpush.bf16.msra.mxu0 0
        %1220 = vmatpush.bf16.msra.mxu0 0
        %1221 = vmatpush.bf16.msra.mxu0 %v1212
        %1222 = vmatmul.bf16.gmra.mxu0 %v1209
        %v1223 = vpop.f32.mrf.mxu0
        %v1224 = vadd.f32 0.0, %v1223
        %v1225 = vpop.f32.mrf.mxu0
        %1226 = vdwg.mxu0
        %1227 = vrot.lane.b32.xlu0 %v952, 112
        %v1228 = vpop.permute.xlu0 %1227
        %v1230 = vsel %vm858, %v1138, 0
        %v1233 = vsel %vm1147, %v1228, 0
        %1235 = vmatpush.bf16.msra.mxu0 0
        %1236 = vmatpush.bf16.msra.mxu0 0
        %1237 = vmatpush.bf16.msra.mxu0 0
        %1238 = vmatpush.bf16.msra.mxu0 0
        %1239 = vmatpush.bf16.msra.mxu0 0
        %1240 = vmatpush.bf16.msra.mxu0 0
        %1241 = vmatpush.bf16.msra.mxu0 0
        %1242 = vmatpush.bf16.msra.mxu0 %v1233
        %1243 = vmatmul.bf16.gmra.mxu0 %v1230
        %v1244 = vpop.f32.mrf.mxu0
        %v1245 = vadd.f32 0.0, %v1244
        %v1246 = vpop.f32.mrf.mxu0
        %1247 = vdwg.mxu0
        %1248 = vrot.lane.b32.xlu0 %v976, 112
        %v1249 = vpop.permute.xlu0 %1248
        %v1251 = vsel %vm858, %v1139, 0
        %v1254 = vsel %vm1147, %v1249, 0
        %1256 = vmatpush.bf16.msra.mxu0 0
        %1257 = vmatpush.bf16.msra.mxu0 0
        %1258 = vmatpush.bf16.msra.mxu0 0
        %1259 = vmatpush.bf16.msra.mxu0 0
        %1260 = vmatpush.bf16.msra.mxu0 0
        %1261 = vmatpush.bf16.msra.mxu0 0
        %1262 = vmatpush.bf16.msra.mxu0 0
        %1263 = vmatpush.bf16.msra.mxu0 %v1254
        %1264 = vmatmul.bf16.gmra.mxu0 %v1251
        %v1265 = vpop.f32.mrf.mxu0
        %v1266 = vadd.f32 0.0, %v1265
        %v1267 = vpop.f32.mrf.mxu0
        %1268 = vdwg.mxu0
        %1269 = vrot.lane.b32.xlu0 %v1000, 112
        %v1270 = vpop.permute.xlu0 %1269
        %v1272 = vsel %vm858, %v1140, 0
        %v1275 = vsel %vm1147, %v1270, 0
        %1277 = vmatpush.bf16.msra.mxu0 0
        %1278 = vmatpush.bf16.msra.mxu0 0
        %1279 = vmatpush.bf16.msra.mxu0 0
        %1280 = vmatpush.bf16.msra.mxu0 0
        %1281 = vmatpush.bf16.msra.mxu0 0
        %1282 = vmatpush.bf16.msra.mxu0 0
        %1283 = vmatpush.bf16.msra.mxu0 0
        %1284 = vmatpush.bf16.msra.mxu0 %v1275
        %1285 = vmatmul.bf16.gmra.mxu0 %v1272
        %v1286 = vpop.f32.mrf.mxu0
        %v1287 = vadd.f32 0.0, %v1286
        %v1288 = vpop.f32.mrf.mxu0
        %1289 = vdwg.mxu0
        %1290 = vrot.lane.b32.xlu0 %v1024, 112
        %v1291 = vpop.permute.xlu0 %1290
        %v1293 = vsel %vm858, %v1141, 0
        %v1296 = vsel %vm1147, %v1291, 0
        %1298 = vmatpush.bf16.msra.mxu0 0
        %1299 = vmatpush.bf16.msra.mxu0 0
        %1300 = vmatpush.bf16.msra.mxu0 0
        %1301 = vmatpush.bf16.msra.mxu0 0
        %1302 = vmatpush.bf16.msra.mxu0 0
        %1303 = vmatpush.bf16.msra.mxu0 0
        %1304 = vmatpush.bf16.msra.mxu0 0
        %1305 = vmatpush.bf16.msra.mxu0 %v1296
        %1306 = vmatmul.bf16.gmra.mxu0 %v1293
        %v1307 = vpop.f32.mrf.mxu0
        %v1308 = vadd.f32 0.0, %v1307
        %v1309 = vpop.f32.mrf.mxu0
        %1310 = vdwg.mxu0
        %v1311 = vld [vmem:[%s559] sm:$0xf]
        %v1312 = vld [vmem:[%s559 + $0x4] sm:$0xf]
        %v1313 = vld [vmem:[%s559 + $0x8] sm:$0xf]
        %v1314 = vld [vmem:[%s559 + $0xc] sm:$0xf]
        %v1315 = vpack.c.bf16 %v1161, %v1161
        %v1316 = vpack.c.bf16 %v1182, %v1182
        %v1317 = vpack.c.bf16 %v1203, %v1203
        %v1318 = vpack.c.bf16 %v1224, %v1224
        %v1319 = vpack.c.bf16 %v1245, %v1245
        %v1320 = vpack.c.bf16 %v1266, %v1266
        %v1321 = vpack.c.bf16 %v1287, %v1287
        %v1322 = vpack.c.bf16 %v1308, %v1308
        %v1324 = vsel %vm858, %v1315, 0
        %v1327 = vsel %vm1147, %v1311, 0
        %1329 = vmatpush.bf16.msra.mxu0 0
        %1330 = vmatpush.bf16.msra.mxu0 0
        %1331 = vmatpush.bf16.msra.mxu0 0
        %1332 = vmatpush.bf16.msra.mxu0 0
        %1333 = vmatpush.bf16.msra.mxu0 0
        %1334 = vmatpush.bf16.msra.mxu0 0
        %1335 = vmatpush.bf16.msra.mxu0 0
        %1336 = vmatpush.bf16.msra.mxu0 %v1327
        %1337 = vmatmul.bf16.gmra.mxu0 %v1324
        %v1338 = vpop.f32.mrf.mxu0
        %v1339 = vadd.f32 0.0, %v1338
        %v1340 = vpop.f32.mrf.mxu0
        %1341 = vdwg.mxu0
        %v1343 = vsel %vm858, %v1316, 0
        %v1346 = vsel %vm1147, %v1312, 0
        %1348 = vmatpush.bf16.msra.mxu0 0
        %1349 = vmatpush.bf16.msra.mxu0 0
        %1350 = vmatpush.bf16.msra.mxu0 0
        %1351 = vmatpush.bf16.msra.mxu0 0
        %1352 = vmatpush.bf16.msra.mxu0 0
        %1353 = vmatpush.bf16.msra.mxu0 0
        %1354 = vmatpush.bf16.msra.mxu0 0
        %1355 = vmatpush.bf16.msra.mxu0 %v1346
        %1356 = vmatmul.bf16.gmra.mxu0 %v1343
        %v1357 = vpop.f32.mrf.mxu0
        %v1358 = vadd.f32 0.0, %v1357
        %v1359 = vpop.f32.mrf.mxu0
        %1360 = vdwg.mxu0
        %v1362 = vsel %vm858, %v1317, 0
        %v1365 = vsel %vm1147, %v1313, 0
        %1367 = vmatpush.bf16.msra.mxu0 0
        %1368 = vmatpush.bf16.msra.mxu0 0
        %1369 = vmatpush.bf16.msra.mxu0 0
        %1370 = vmatpush.bf16.msra.mxu0 0
        %1371 = vmatpush.bf16.msra.mxu0 0
        %1372 = vmatpush.bf16.msra.mxu0 0
        %1373 = vmatpush.bf16.msra.mxu0 0
        %1374 = vmatpush.bf16.msra.mxu0 %v1365
        %1375 = vmatmul.bf16.gmra.mxu0 %v1362
        %v1376 = vpop.f32.mrf.mxu0
        %v1377 = vadd.f32 0.0, %v1376
        %v1378 = vpop.f32.mrf.mxu0
        %1379 = vdwg.mxu0
        %v1381 = vsel %vm858, %v1318, 0
        %v1384 = vsel %vm1147, %v1314, 0
        %1386 = vmatpush.bf16.msra.mxu0 0
        %1387 = vmatpush.bf16.msra.mxu0 0
        %1388 = vmatpush.bf16.msra.mxu0 0
        %1389 = vmatpush.bf16.msra.mxu0 0
        %1390 = vmatpush.bf16.msra.mxu0 0
        %1391 = vmatpush.bf16.msra.mxu0 0
        %1392 = vmatpush.bf16.msra.mxu0 0
        %1393 = vmatpush.bf16.msra.mxu0 %v1384
        %1394 = vmatmul.bf16.gmra.mxu0 %v1381
        %v1395 = vpop.f32.mrf.mxu0
        %v1396 = vadd.f32 0.0, %v1395
        %v1397 = vpop.f32.mrf.mxu0
        %1398 = vdwg.mxu0
        %v1400 = vsel %vm858, %v1319, 0
        %1402 = vmatpush.bf16.msra.mxu0 0
        %1403 = vmatpush.bf16.msra.mxu0 0
        %1404 = vmatpush.bf16.msra.mxu0 0
        %1405 = vmatpush.bf16.msra.mxu0 0
        %1406 = vmatpush.bf16.msra.mxu0 0
        %1407 = vmatpush.bf16.msra.mxu0 0
        %1408 = vmatpush.bf16.msra.mxu0 0
        %1409 = vmatpush.bf16.msra.mxu0 %v1327
        %1410 = vmatmul.bf16.gmra.mxu0 %v1400
        %v1411 = vpop.f32.mrf.mxu0
        %v1412 = vadd.f32 0.0, %v1411
        %v1413 = vpop.f32.mrf.mxu0
        %1414 = vdwg.mxu0
        %v1416 = vsel %vm858, %v1320, 0
        %1418 = vmatpush.bf16.msra.mxu0 0
        %1419 = vmatpush.bf16.msra.mxu0 0
        %1420 = vmatpush.bf16.msra.mxu0 0
        %1421 = vmatpush.bf16.msra.mxu0 0
        %1422 = vmatpush.bf16.msra.mxu0 0
        %1423 = vmatpush.bf16.msra.mxu0 0
        %1424 = vmatpush.bf16.msra.mxu0 0
        %1425 = vmatpush.bf16.msra.mxu0 %v1346
        %1426 = vmatmul.bf16.gmra.mxu0 %v1416
        %v1427 = vpop.f32.mrf.mxu0
        %v1428 = vadd.f32 0.0, %v1427
        %v1429 = vpop.f32.mrf.mxu0
        %1430 = vdwg.mxu0
        %v1432 = vsel %vm858, %v1321, 0
        %1434 = vmatpush.bf16.msra.mxu0 0
        %1435 = vmatpush.bf16.msra.mxu0 0
        %1436 = vmatpush.bf16.msra.mxu0 0
        %1437 = vmatpush.bf16.msra.mxu0 0
        %1438 = vmatpush.bf16.msra.mxu0 0
        %1439 = vmatpush.bf16.msra.mxu0 0
        %1440 = vmatpush.bf16.msra.mxu0 0
        %1441 = vmatpush.bf16.msra.mxu0 %v1365
        %1442 = vmatmul.bf16.gmra.mxu0 %v1432
        %v1443 = vpop.f32.mrf.mxu0
        %v1444 = vadd.f32 0.0, %v1443
        %v1445 = vpop.f32.mrf.mxu0
        %1446 = vdwg.mxu0
        %v1448 = vsel %vm858, %v1322, 0
        %1450 = vmatpush.bf16.msra.mxu0 0
        %1451 = vmatpush.bf16.msra.mxu0 0
        %1452 = vmatpush.bf16.msra.mxu0 0
        %1453 = vmatpush.bf16.msra.mxu0 0
        %1454 = vmatpush.bf16.msra.mxu0 0
        %1455 = vmatpush.bf16.msra.mxu0 0
        %1456 = vmatpush.bf16.msra.mxu0 0
        %1457 = vmatpush.bf16.msra.mxu0 %v1384
        %1458 = vmatmul.bf16.gmra.mxu0 %v1448
        %v1459 = vpop.f32.mrf.mxu0
        %v1460 = vadd.f32 0.0, %v1459
        %v1461 = vpop.f32.mrf.mxu0
        %1462 = vdwg.mxu0
        %v1463 = vadd.f32 %v1339, %v1358
        %v1464 = vadd.f32 %v1412, %v1428
        %v1465 = vadd.f32 %v1463, %v1377
        %v1466 = vadd.f32 %v1464, %v1444
        %v1467 = vadd.f32 %v1465, %v1396
        %v1468 = vadd.f32 %v1466, %v1460
        %v1469 = vld [vmem:[%s562] sm:$0x1]
        %v1471 = vperm.slane %v1469, 0
        %v1473 = vadd.f32 %v1467, %v1471
        %v1474 = vadd.f32 %v1468, %v1471
        %v1475 = vadd.f32 %v1473, %v595
        %v1476 = vadd.f32 %v1474, %v596
        %v1477 = vld [vmem:[%s565] sm:$0x1]
        %v1478 = vld [vmem:[%s568] sm:$0x1]
        %v1479 = vsel %vm599, %v1475, 0.0
        %1480 = vadd.xlane.f32.xlu0 %v1479
        %v1481 = vpop.xlane.xlu0 %1480
        %v1482 = vsel %vm599, %v1476, 0.0
        %1483 = vadd.xlane.f32.xlu0 %v1482
        %v1484 = vpop.xlane.xlu0 %1483
        %v1485 = vmul.f32 %v1481, %v612
        %v1486 = vmul.f32 %v1484, %v612
        %v1487 = vsub.f32 %v1475, %v1485
        %v1488 = vsub.f32 %v1476, %v1486
        %v1489 = vmul.f32 %v1487, %v1487
        %v1490 = vmul.f32 %v1488, %v1488
        %v1491 = vsel %vm599, %v1489, 0.0
        %1492 = vadd.xlane.f32.xlu0 %v1491
        %v1493 = vpop.xlane.xlu0 %1492
        %v1494 = vsel %vm599, %v1490, 0.0
        %1495 = vadd.xlane.f32.xlu0 %v1494
        %v1496 = vpop.xlane.xlu0 %1495
        %v1497 = vmul.f32 %v1493, %v612
        %v1498 = vmul.f32 %v1496, %v612
        %v1499 = vadd.f32 %v1497, 1e-05
        %v1500 = vadd.f32 %v1498, 1e-05
        %v1501 = vrsqrt.pop %v1499
        %v1502 = vmul.f32 %v1501, %v1499
        %v1503 = vmul.f32 %v1502, %v1501
        %v1504 = vmul.f32 0.5, %v1503
        %v1505 = vsub.f32 1.5, %v1504
        %v1506 = vmul.f32 %v1501, %v1505
        %vm1507 = vweird.f32 %v1499
        %vm1508 = vweird.f32 %v1501
        %vm1509 = vmor %vm1507, %vm1508
        %v1510 = vsel %vm1509, %v1501, %v1506
        %v1511 = vrsqrt.pop %v1500
        %v1512 = vmul.f32 %v1511, %v1500
        %v1513 = vmul.f32 %v1512, %v1511
        %v1514 = vmul.f32 0.5, %v1513
        %v1515 = vsub.f32 1.5, %v1514
        %v1516 = vmul.f32 %v1511, %v1515
        %vm1517 = vweird.f32 %v1500
        %vm1518 = vweird.f32 %v1511
        %vm1519 = vmor %vm1517, %vm1518
        %v1520 = vsel %vm1519, %v1511, %v1516
        %v1521 = vmul.f32 %v1487, %v1510
        %v1522 = vmul.f32 %v1488, %v1520
        %v1524 = vperm.slane %v1477, 0
        %v1526 = vmul.f32 %v1521, %v1524
        %v1527 = vmul.f32 %v1522, %v1524
        %v1529 = vperm.slane %v1478, 0
        %v1531 = vadd.f32 %v1526, %v1529
        %v1532 = vadd.f32 %v1527, %v1529
        %v1533 = vpack.c.bf16 %v1532, %v1531
        %v1534 = vld [vmem:[%s573] sm:$0xf]
        %v1535 = vld [vmem:[%s573 + $0x4] sm:$0xf]
        %v1536 = vld [vmem:[%s573 + $0x8] sm:$0xf]
        %v1537 = vld [vmem:[%s573 + $0xc] sm:$0xf]
        %v1538 = vld [vmem:[%s576] sm:$0x1]
        %v1540 = vperm.slane %v1538, 0
        %v1546 = vunpack.c.l.b16 %v1534
        %v1547 = vunpack.c.l.b16 %v1535
        %v1548 = vunpack.c.l.b16 %v1536
        %v1549 = vunpack.c.l.b16 %v1537
        %v1550 = vpack.c.b16 %v1547, %v1546
        %v1551 = vpack.c.b16 %v1549, %v1548
        %v1555 = vsel %vm599, %v1533, 0
        %1557 = vmatpush.bf16.msra.mxu0 0
        %1558 = vmatpush.bf16.msra.mxu0 0
        %1559 = vmatpush.bf16.msra.mxu0 0
        %1560 = vmatpush.bf16.msra.mxu0 0
        %1561 = vmatpush.bf16.msra.mxu0 0
        %1562 = vmatpush.bf16.msra.mxu0 0
        %1563 = vmatpush.bf16.msra.mxu0 %v1551
        %1564 = vmatpush.bf16.msra.mxu0 %v1550
        %1565 = vmatmul.bf16.gmra.mxu0 %v1555
        %v1566 = vpop.f32.mrf.mxu0
        %v1567 = vadd.f32 %v1540, %v1566
        %v1568 = vpop.f32.mrf.mxu0
        %v1569 = vadd.f32 %v1540, %v1568
        %1570 = vdwg.mxu0
        %v1571 = vmul.f32 %v1567, 0.5
        %v1572 = vmul.f32 %v1569, 0.5
        %v1573 = vmul.f32 %v1567, 0.044715
        %v1574 = vmul.f32 %v1569, 0.044715
        %v1575 = vmul.f32 %v1573, %v1567
        %v1576 = vmul.f32 %v1574, %v1569
        %v1577 = vmul.f32 %v1575, %v1567
        %v1578 = vmul.f32 %v1576, %v1569
        %v1579 = vadd.f32 %v1567, %v1577
        %v1580 = vadd.f32 %v1569, %v1578
        %v1581 = vmul.f32 %v1579, 0.7978846
        %v1582 = vmul.f32 %v1580, 0.7978846
        %v1583 = vtanh.pop %v1581
        %v1584 = vtanh.pop %v1582
        %v1585 = vadd.f32 %v1583, 1.0
        %v1586 = vadd.f32 %v1584, 1.0
        %v1587 = vmul.f32 %v1571, %v1585
        %v1588 = vmul.f32 %v1572, %v1586
        %v1589 = vpack.c.bf16 %v1588, %v1587
        %v1590 = vld [vmem:[%s581] sm:$0xf]
        %v1591 = vld [vmem:[%s581 + $0x4] sm:$0xf]
        %v1592 = vld [vmem:[%s581 + $0x8] sm:$0xf]
        %v1593 = vld [vmem:[%s581 + $0xc] sm:$0xf]
        %v1594 = vld [vmem:[%s581 + $0x10] sm:$0xf]
        %v1595 = vld [vmem:[%s581 + $0x14] sm:$0xf]
        %v1596 = vld [vmem:[%s581 + $0x18] sm:$0xf]
        %v1597 = vld [vmem:[%s581 + $0x1c] sm:$0xf]
        %v1598 = vld [vmem:[%s584] sm:$0x1]
        %v1600 = vperm.slane %v1598, 0
        %v1610 = vunpack.c.l.b16 %v1590
        %v1611 = vunpack.c.l.b16 %v1591
        %v1612 = vunpack.c.l.b16 %v1592
        %v1613 = vunpack.c.l.b16 %v1593
        %v1614 = vunpack.c.l.b16 %v1594
        %v1615 = vunpack.c.l.b16 %v1595
        %v1616 = vunpack.c.l.b16 %v1596
        %v1617 = vunpack.c.l.b16 %v1597
        %v1618 = vpack.c.b16 %v1611, %v1610
        %v1619 = vpack.c.b16 %v1613, %v1612
        %v1620 = vpack.c.b16 %v1615, %v1614
        %v1621 = vpack.c.b16 %v1617, %v1616
        %vm1626 = vcmask 523264
        %v1628 = vsel %vm1626, %v1589, 0
        %1630 = vmatpush.bf16.msra.mxu0 0
        %1631 = vmatpush.bf16.msra.mxu0 0
        %1632 = vmatpush.bf16.msra.mxu0 0
        %1633 = vmatpush.bf16.msra.mxu0 0
        %1634 = vmatpush.bf16.msra.mxu0 %v1621
        %1635 = vmatpush.bf16.msra.mxu0 %v1620
        %1636 = vmatpush.bf16.msra.mxu0 %v1619
        %1637 = vmatpush.bf16.msra.mxu0 %v1618
        %1638 = vmatmul.bf16.gmra.mxu0 %v1628
        %v1639 = vpop.f32.mrf.mxu0
        %v1640 = vadd.f32 %v1600, %v1639
        %v1641 = vpop.f32.mrf.mxu0
        %v1642 = vadd.f32 %v1600, %v1641
        %1643 = vdwg.mxu0
        %v1644 = vadd.f32 %v1640, %v1475
        %v1645 = vadd.f32 %v1642, %v1476
        %1646 = vst.msk [vmem:[#allocation2] sm:$0xff] %vm599, %v1644
        %1647 = vst.msk [vmem:[#allocation2 + $0x8] sm:$0xff] %vm599, %v1645
        // Predicated region
        $region77: #{tpu_custom_call.1} parent=71 // pred_check
          %p1648 = pneg %p366
        $region78: #{tpu_custom_call.1} parent=71 // pred_check_branch
          %1650 = sbr.rel (%p1648) target = $region80
        $region79: #{tpu_custom_call.1} parent=71 // pred_region
          %1652 = vsyncadd [#allocation3], 0
          %s1653 = sshll.u32 [#allocation2], 4
          %s1654 = int_to_ptr.vmem [resolvable:$true] %s1653
          %s1655 = sshll.u32 %s13, 4
          %s1656 = int_to_ptr.hbm [resolvable:$true] %s1655
          %1661 = dma.vmem_to_hbm [thread:$0]  %s1654, 256, %s1656, [#allocation3], 128, 128, 8
        $region80: #{tpu_custom_call.1} parent=71 // pred_fallthru
          _
        // Predicated region
        $region81: #{tpu_custom_call.1} parent=71 // pred_check
          %p1662 = pneg %p366
        $region82: #{tpu_custom_call.1} parent=71 // pred_check_branch
          %1664 = sbr.rel (%p1662) target = $region84
        $region83: #{tpu_custom_call.1} parent=71 // pred_region
          %1666 = dma.done [#allocation3], 256
        $region84: #{tpu_custom_call.1} parent=71 // pred_fallthru
          _
      $region72: #{tpu_custom_call.1} parent=5 // pred_fallthru
        _
      %p1667 = scmp.le.s32.totalorder 2, %s20
      // Predicated region
      $region85: #{tpu_custom_call.1} parent=5 // pred_check
        %p1668 = pneg %p1667
      $region86: #{tpu_custom_call.1} parent=5 // pred_check_branch
        %1670 = sbr.rel (%p1668) target = $region88
      $region87: #{tpu_custom_call.1} parent=5 // pred_region
        %s1671 = ssub.s32 %s20, 2
      $region88: #{tpu_custom_call.1} parent=5 // pred_fallthru
        _
    $region6: #{tpu_custom_call.1} parent=1 // loop_footer
      %s24 = sadd.s32 1, %s20
    $region7: #{tpu_custom_call.1} parent=1 // loop_footer_branch
      %19 = sbr.rel target = $region3
    $region8: #{tpu_custom_call.1} parent=1 // loop_exit
      _
    %1672 = vsyncpa [#allocation3], 1
    %s1673 = scalar_lea.sflag [#allocation3], 1
    %1674 = vsyncpa %s1673, 1

</llo_original>
